<compile_context>
chip_gen: v7x
topology: tpu7x:2x2x1
jax: 0.10.0
libtpu: 0.0.40
codegen_flags: <defaults>
</compile_context>

<pallas_src>
import functools

import jax
import jax.numpy as jnp
from jax.experimental import pallas as pl
from jax.experimental.pallas import tpu as pltpu


def _spatial_gate_kernel(x_ref, w_ref, b_ref, o_ref, *, C, H, W, KS):
    """Processes one (Nb, C, H*W) lane-dense block per grid step.

    x_ref: (Nb, C, HW) VMEM   input block (H*W on the lane axis)
    w_ref: (2*KS*KS,)  SMEM   conv weights, BN folded: [max-channel taps | mean-channel taps]
    b_ref: (1,)        SMEM   conv bias, BN folded
    o_ref: (Nb, C, HW) VMEM   output block
    """
    Nb = x_ref.shape[0]
    HW = H * W
    pad = (KS - 1) // 2
    R = 2 * Nb

    # ---- ChannelPool (vectorized): one block read, sublane reductions over C. ----
    xf = x_ref[...]                                               # (Nb, C, HW) input dtype
    cmax = jnp.max(xf, axis=1).astype(jnp.float32)                # (Nb, HW)
    cmean = jnp.sum(xf.astype(jnp.float32), axis=1) * (1.0 / C)   # (Nb, HW)

    # Stack both pooled channels on the sublane axis: one roll serves both, and Nb
    # (not a singleton channel dim) fills sublanes.
    pooled = jnp.concatenate([cmax, cmean], axis=0)               # (2*Nb, HW) f32

    # Per-row tap-weight selectors: rows [0,Nb) use the max-channel taps, rows
    # [Nb,2*Nb) the mean-channel taps. Constant (R,1) vectors, hoisted out of the loop.
    ones = jnp.ones((Nb, 1), jnp.float32)
    zeros = jnp.zeros((Nb, 1), jnp.float32)
    is_max_f = jnp.concatenate([ones, zeros], axis=0)             # (R, 1)
    is_mean_f = jnp.concatenate([zeros, ones], axis=0)            # (R, 1)

    # Lane -> (row, col) of the flattened spatial index (1-sublane arrays, computed once).
    lane = jax.lax.broadcasted_iota(jnp.int32, (1, HW), 1)
    if (W & (W - 1)) == 0:                                        # power-of-two width
        col = lane & (W - 1)
        row = lane >> (W.bit_length() - 1)
    else:
        col = lane % W
        row = lane // W
    # 7 column-edge masks (shared by every kh); kw == pad needs no mask.
    col_ok = [None if kw == pad
              else (col >= pad - kw) & (col <= (W - 1) + pad - kw)
              for kw in range(KS)]

    # ---- 7x7 "same" conv (2 -> 1 channel) on the flattened lane axis. ----
    # roll(P, -(dh*W)) followed by roll(., -dw) equals roll(P, -(dh*W+dw)). The row mask
    # is applied once per kh on the row-rolled tensor (equivalent: whenever the column
    # mask passes, the dw shift does not change the image row); the column mask is the
    # only per-tap mask. Rolls go to the XLU slot and co-issue with the VPU MACs.
    acc = jnp.zeros((R, HW), dtype=jnp.float32)
    for kh in range(KS):
        dh = kh - pad
        p_h = pooled if dh == 0 else pltpu.roll(pooled, (-(dh * W)) % HW, 1)
        if dh != 0:
            row_ok = (row >= pad - kh) & (row <= (H - 1) + pad - kh)
            p_h = jnp.where(row_ok, p_h, 0.0)
        for kw in range(KS):
            dw = kw - pad
            v = p_h if dw == 0 else pltpu.roll(p_h, (-dw) % HW, 1)
            w_col = (w_ref[kh * KS + kw] * is_max_f
                     + w_ref[KS * KS + kh * KS + kw] * is_mean_f)   # (R, 1)
            contrib = w_col * v                                      # (R, HW)
            if col_ok[kw] is not None:
                contrib = jnp.where(col_ok[kw], contrib, 0.0)
            acc = acc + contrib

    conv = acc[:Nb, :] + acc[Nb:, :]                               # (Nb, HW) max+mean taps

    # ---- bias + ReLU (applied because use_relu=False) + sigmoid gate ----
    scale = jax.nn.sigmoid(jnp.maximum(conv + b_ref[0], 0.0))      # (Nb, HW) f32

    # ---- gate the input: single sublane broadcast across C, one dense block store.
    # For bf16 inputs the multiply stays in bf16 (no full-block f32 temp).
    scale_c = scale[:, None, :].astype(xf.dtype)                   # (Nb, 1, HW)
    o_ref[...] = (xf * scale_c).astype(o_ref.dtype)


def _num_tensorcores():
    """Best-effort TensorCore count per device (v5e/v6e: 1, v7x-style: 2)."""
    try:
        info = pltpu.get_tpu_info()
        for name in ("num_cores", "core_count", "num_tensorcores"):
            v = getattr(info, name, None)
            if v:
                return int(v)
    except Exception:
        pass
    try:
        d = jax.devices()[0]
        v = getattr(d, "num_cores", None) or getattr(d, "core_count", None)
        if v:
            return int(v)
    except Exception:
        pass
    return 1


def _vmem_capacity_bytes(num_cores):
    cap = 0
    try:
        cap = int(getattr(pltpu.get_tpu_info(), "vmem_capacity_bytes", 0) or 0)
    except Exception:
        cap = 0
    if cap <= 0:
        cap = 64 * 1024 * 1024          # conservative default (v7x per-core VMEM)
    if num_cores >= 2:
        cap = min(cap, 64 * 1024 * 1024)  # guard against per-chip reporting on 2-TC parts
    return min(cap, 128 * 1024 * 1024)


def _tile_bytes(nb, C, HW, itemsize):
    """VMEM footprint of one (nb, C, HW) block including (8, 128) tile padding."""
    sub = -(-C // 8) * 8
    lane = -(-HW // 128) * 128
    return nb * sub * lane * itemsize


def _pick_batch_block(N, C, HW, itemsize, vmem_cap, num_cores):
    """Pick images-per-grid-step Nb; returns (Nb, needs_batch_padding)."""
    usable = int(vmem_cap * 0.8)
    # Realistic per-image working set: input block (double-buffered) + output block
    # (double-buffered) + ~2 f32-block-sized in-kernel temporaries.
    per_image = 4 * _tile_bytes(1, C, HW, itemsize) + 2 * _tile_bytes(1, C, HW, 4)
    nb_max = max(1, min(N, usable // max(per_image, 1)))
    if num_cores >= 2 and N >= 2:
        nb_max = min(nb_max, max(1, N // 2))   # keep >=2 grid steps only when 2 TCs exist
    best_div = 1
    for nb in range(1, nb_max + 1):
        if N % nb == 0:
            best_div = nb
    if best_div * 2 >= nb_max:                 # a divisor close to nb_max: no padding needed
        return best_div, False
    return nb_max, True                        # awkward N (e.g. prime): pad the batch


def spatial_gate(x, conv_w, conv_b, bn_gamma, bn_beta, bn_mean, bn_var, eps=1e-5):
    """x: (N, C, H, W); conv_w: (1, 2, KS, KS); BN params: (1,) each."""
    N, C, H, W = x.shape
    KS = conv_w.shape[-1]
    HW = H * W
    itemsize = jnp.dtype(x.dtype).itemsize

    # Fold conv bias + inference-mode BatchNorm into the conv weights / bias:
    #   y = gamma * (conv(x) + b - mean) / sqrt(var + eps) + beta
    a = bn_gamma / jnp.sqrt(bn_var + eps)                               # (1,)
    w_fold = (conv_w[0] * a[0]).astype(jnp.float32).reshape(-1)         # (2*KS*KS,)
    b_fold = (a * (conv_b - bn_mean) + bn_beta).astype(jnp.float32)     # (1,)

    # Lane-dense layout: (N, C, H, W) -> (N, C, H*W) is a free, contiguous reshape.
    x3 = x.reshape(N, C, HW)

    num_cores = _num_tensorcores()
    vmem_cap = _vmem_capacity_bytes(num_cores)
    Nb, pad_batch = _pick_batch_block(N, C, HW, itemsize, vmem_cap, num_cores)
    # TODO(synk): for very large C*HW where even Nb=1 exceeds VMEM (v7x 64 MiB), add a
    # two-pass C-tiled variant (pooling pass accumulating (Nb,HW), then a gating pass).

    if pad_batch:
        Np = -(-N // Nb) * Nb
        x3 = jnp.pad(x3, ((0, Np - N), (0, 0), (0, 0)))
    else:
        Np = N
    grid = (Np // Nb,)

    per_image = 4 * _tile_bytes(1, C, HW, itemsize) + 2 * _tile_bytes(1, C, HW, 4)
    vmem_limit = int(min(vmem_cap, max(Nb * per_image + (4 << 20), 32 << 20)))

    cost = pl.CostEstimate(
        flops=int(N * HW * (6 * KS * KS) + 4 * N * C * HW),
        transcendentals=int(N * HW),
        bytes_accessed=int(2 * N * C * HW * itemsize),
    )

    kernel = functools.partial(_spatial_gate_kernel, C=C, H=H, W=W, KS=KS)

    out3 = pl.pallas_call(
        kernel,
        out_shape=jax.ShapeDtypeStruct((Np, C, HW), x.dtype),
        grid_spec=pltpu.PrefetchScalarGridSpec(
            num_scalar_prefetch=0,
            grid=grid,
            in_specs=[
                pl.BlockSpec((Nb, C, HW), lambda n: (n, 0, 0)),
                pl.BlockSpec(memory_space=pltpu.MemorySpace.SMEM),  # folded conv weights
                pl.BlockSpec(memory_space=pltpu.MemorySpace.SMEM),  # folded conv bias
            ],
            out_specs=pl.BlockSpec((Nb, C, HW), lambda n: (n, 0, 0)),
        ),
        compiler_params=pltpu.CompilerParams(
            dimension_semantics=("parallel",),
            vmem_limit_bytes=vmem_limit,
        ),
        cost_estimate=cost,
    )(x3, w_fold, b_fold)

    if pad_batch:
        out3 = out3[:N]
    return out3.reshape(N, C, H, W)


def spatial_gate_reference(x, conv_w, conv_b, bn_gamma, bn_beta, bn_mean, bn_var, eps=1e-5):
    """Pure-JAX reference of the PyTorch forward (inference-mode BN)."""
    cmax = jnp.max(x, axis=1, keepdims=True)
    cmean = jnp.mean(x, axis=1, keepdims=True)
    xc = jnp.concatenate([cmax, cmean], axis=1)  # (N, 2, H, W)
    pad = (conv_w.shape[-1] - 1) // 2
    y = jax.lax.conv_general_dilated(
        xc, conv_w, window_strides=(1, 1),
        padding=[(pad, pad), (pad, pad)],
        dimension_numbers=("NCHW", "OIHW", "NCHW"),
        precision=jax.lax.Precision.HIGHEST,
    )
    y = y + conv_b[None, :, None, None]
    y = (bn_gamma[None, :, None, None] * (y - bn_mean[None, :, None, None])
         / jnp.sqrt(bn_var[None, :, None, None] + eps) + bn_beta[None, :, None, None])
    y = jnp.maximum(y, 0.0)
    return x * jax.nn.sigmoid(y)


if __name__ == "__main__":
    key = jax.random.PRNGKey(0)
    k_x, k_w = jax.random.split(key)

    N, C, H, W = 2, 4, 16, 16
    x = jax.random.normal(k_x, (N, C, H, W), dtype=jnp.float32)

    # Deterministic parameters matching nn.Conv2d(2, 1, 7, bias=True) + BatchNorm2d(1)
    conv_w = 0.1 * jax.random.normal(k_w, (1, 2, 7, 7), dtype=jnp.float32)
    conv_b = jnp.array([0.05], dtype=jnp.float32)
    bn_gamma = jnp.array([1.2], dtype=jnp.float32)
    bn_beta = jnp.array([0.1], dtype=jnp.float32)
    bn_mean = jnp.array([0.05], dtype=jnp.float32)
    bn_var = jnp.array([0.9], dtype=jnp.float32)

    out = spatial_gate(x, conv_w, conv_b, bn_gamma, bn_beta, bn_mean, bn_var)
    out = jax.block_until_ready(out)

    ref = spatial_gate_reference(x, conv_w, conv_b, bn_gamma, bn_beta, bn_mean, bn_var)
    assert out.shape == (N, C, H, W)
    assert jnp.allclose(out, ref, rtol=1e-5, atol=1e-5), "mismatch vs JAX reference"

    print("KERNEL_OK")
</pallas_src>

<mosaic_0001>
module attributes {stable_mosaic.version = 11 : i64} {
  func.func @_spatial_gate_kernel(%arg0: i32, %arg1: memref<2x4x256xf32, #tpu.memory_space<vmem>>, %arg2: memref<98xf32, #tpu.memory_space<smem>>, %arg3: memref<1xf32, #tpu.memory_space<smem>>, %arg4: memref<2x4x256xf32, #tpu.memory_space<vmem>>) attributes {dimension_semantics = [#tpu.dimension_semantics<parallel>], iteration_bounds = array<i64: 1>, scalar_prefetch = 0 : i64, scratch_operands = 0 : i64, tpu.core_type = #tpu.core_type<tc>, window_params = [{transform_indices = @transform_0, window_bounds = array<i64: 2, 4, 256>}, {transform_indices = @transform_1, window_bounds = array<i64: 98>}, {transform_indices = @transform_2, window_bounds = array<i64: 1>}, {transform_indices = @transform_3, window_bounds = array<i64: 2, 4, 256>}]} {
    %c0 = arith.constant 0 : index
    %c0_0 = arith.constant 0 : index
    %c0_1 = arith.constant 0 : index
    %0 = vector.load %arg1[%c0, %c0_0, %c0_1] : memref<2x4x256xf32, #tpu.memory_space<vmem>>, vector<2x4x256xf32>
    %cst = arith.constant dense<0xFF800000> : vector<2x256xf32>
    %1 = vector.multi_reduction <maximumf>, %0, %cst [1] : vector<2x4x256xf32> to vector<2x256xf32>
    %cst_2 = arith.constant dense<0.000000e+00> : vector<2x256xf32>
    %2 = vector.multi_reduction <add>, %0, %cst_2 [1] : vector<2x4x256xf32> to vector<2x256xf32>
    %cst_3 = arith.constant 2.500000e-01 : f32
    %3 = vector.broadcast %cst_3 : f32 to vector<2x256xf32>
    %4 = arith.mulf %2, %3 : vector<2x256xf32>
    %5 = tpu.concatenate %1, %4 in 0 : vector<2x256xf32>, vector<2x256xf32> -> vector<4x256xf32>
    %cst_4 = arith.constant 1.000000e+00 : f32
    %6 = vector.broadcast %cst_4 : f32 to vector<2x1xf32>
    %cst_5 = arith.constant 0.000000e+00 : f32
    %7 = vector.broadcast %cst_5 : f32 to vector<2x1xf32>
    %8 = tpu.concatenate %6, %7 in 0 : vector<2x1xf32>, vector<2x1xf32> -> vector<4x1xf32>
    %9 = tpu.concatenate %7, %6 in 0 : vector<2x1xf32>, vector<2x1xf32> -> vector<4x1xf32>
    %10 = tpu.iota {dimensions = array<i32: 1>} : vector<1x256xi32>
    %c15_i32 = arith.constant 15 : i32
    %11 = vector.broadcast %c15_i32 : i32 to vector<1x256xi32>
    %12 = arith.andi %10, %11 : vector<1x256xi32>
    %c4_i32 = arith.constant 4 : i32
    %13 = vector.broadcast %c4_i32 : i32 to vector<1x256xi32>
    %14 = arith.shrsi %10, %13 : vector<1x256xi32>
    %c3_i32 = arith.constant 3 : i32
    %15 = vector.broadcast %c3_i32 : i32 to vector<1x256xi32>
    %16 = arith.cmpi sge, %12, %15 : vector<1x256xi32>
    %c18_i32 = arith.constant 18 : i32
    %17 = vector.broadcast %c18_i32 : i32 to vector<1x256xi32>
    %18 = arith.cmpi sle, %12, %17 : vector<1x256xi32>
    %19 = arith.andi %16, %18 : vector<1x256xi1>
    %c2_i32 = arith.constant 2 : i32
    %20 = vector.broadcast %c2_i32 : i32 to vector<1x256xi32>
    %21 = arith.cmpi sge, %12, %20 : vector<1x256xi32>
    %c17_i32 = arith.constant 17 : i32
    %22 = vector.broadcast %c17_i32 : i32 to vector<1x256xi32>
    %23 = arith.cmpi sle, %12, %22 : vector<1x256xi32>
    %24 = arith.andi %21, %23 : vector<1x256xi1>
    %c1_i32 = arith.constant 1 : i32
    %25 = vector.broadcast %c1_i32 : i32 to vector<1x256xi32>
    %26 = arith.cmpi sge, %12, %25 : vector<1x256xi32>
    %c16_i32 = arith.constant 16 : i32
    %27 = vector.broadcast %c16_i32 : i32 to vector<1x256xi32>
    %28 = arith.cmpi sle, %12, %27 : vector<1x256xi32>
    %29 = arith.andi %26, %28 : vector<1x256xi1>
    %c-1_i32 = arith.constant -1 : i32
    %30 = vector.broadcast %c-1_i32 : i32 to vector<1x256xi32>
    %31 = arith.cmpi sge, %12, %30 : vector<1x256xi32>
    %c14_i32 = arith.constant 14 : i32
    %32 = vector.broadcast %c14_i32 : i32 to vector<1x256xi32>
    %33 = arith.cmpi sle, %12, %32 : vector<1x256xi32>
    %34 = arith.andi %31, %33 : vector<1x256xi1>
    %c-2_i32 = arith.constant -2 : i32
    %35 = vector.broadcast %c-2_i32 : i32 to vector<1x256xi32>
    %36 = arith.cmpi sge, %12, %35 : vector<1x256xi32>
    %c13_i32 = arith.constant 13 : i32
    %37 = vector.broadcast %c13_i32 : i32 to vector<1x256xi32>
    %38 = arith.cmpi sle, %12, %37 : vector<1x256xi32>
    %39 = arith.andi %36, %38 : vector<1x256xi1>
    %c-3_i32 = arith.constant -3 : i32
    %40 = vector.broadcast %c-3_i32 : i32 to vector<1x256xi32>
    %41 = arith.cmpi sge, %12, %40 : vector<1x256xi32>
    %c12_i32 = arith.constant 12 : i32
    %42 = vector.broadcast %c12_i32 : i32 to vector<1x256xi32>
    %43 = arith.cmpi sle, %12, %42 : vector<1x256xi32>
    %44 = arith.andi %41, %43 : vector<1x256xi1>
    %cst_6 = arith.constant 0.000000e+00 : f32
    %45 = vector.broadcast %cst_6 : f32 to vector<4x256xf32>
    %c48_i32 = arith.constant 48 : i32
    %46 = tpu.dynamic_rotate %5 by %c48_i32 dim 1 : vector<4x256xf32>, i32 -> vector<4x256xf32>
    %c3_i32_7 = arith.constant 3 : i32
    %47 = vector.broadcast %c3_i32_7 : i32 to vector<1x256xi32>
    %48 = arith.cmpi sge, %14, %47 : vector<1x256xi32>
    %c18_i32_8 = arith.constant 18 : i32
    %49 = vector.broadcast %c18_i32_8 : i32 to vector<1x256xi32>
    %50 = arith.cmpi sle, %14, %49 : vector<1x256xi32>
    %51 = arith.andi %48, %50 : vector<1x256xi1>
    %cst_9 = arith.constant 0.000000e+00 : f32
    %52 = vector.shape_cast %51 : vector<1x256xi1> to vector<1x256xi1>
    %53 = vector.broadcast %52 : vector<1x256xi1> to vector<4x256xi1>
    %54 = vector.broadcast %cst_9 : f32 to vector<4x256xf32>
    %55 = arith.select %53, %46, %54 : vector<4x256xi1>, vector<4x256xf32>
    %c3_i32_10 = arith.constant 3 : i32
    %56 = tpu.dynamic_rotate %55 by %c3_i32_10 dim 1 : vector<4x256xf32>, i32 -> vector<4x256xf32>
    %c0_11 = arith.constant 0 : index
    %57 = memref.load %arg2[%c0_11] : memref<98xf32, #tpu.memory_space<smem>>
    %58 = vector.broadcast %57 : f32 to vector<4x1xf32>
    %59 = arith.mulf %58, %8 : vector<4x1xf32>
    %c49 = arith.constant 49 : index
    %60 = memref.load %arg2[%c49] : memref<98xf32, #tpu.memory_space<smem>>
    %61 = vector.broadcast %60 : f32 to vector<4x1xf32>
    %62 = arith.mulf %61, %9 : vector<4x1xf32>
    %63 = arith.addf %59, %62 : vector<4x1xf32>
    %64 = vector.broadcast %63 : vector<4x1xf32> to vector<4x256xf32>
    %65 = arith.mulf %64, %56 : vector<4x256xf32>
    %cst_12 = arith.constant 0.000000e+00 : f32
    %66 = vector.shape_cast %19 : vector<1x256xi1> to vector<1x256xi1>
    %67 = vector.broadcast %66 : vector<1x256xi1> to vector<4x256xi1>
    %68 = vector.broadcast %cst_12 : f32 to vector<4x256xf32>
    %69 = arith.select %67, %65, %68 : vector<4x256xi1>, vector<4x256xf32>
    %70 = arith.addf %45, %69 : vector<4x256xf32>
    %c2_i32_13 = arith.constant 2 : i32
    %71 = tpu.dynamic_rotate %55 by %c2_i32_13 dim 1 : vector<4x256xf32>, i32 -> vector<4x256xf32>
    %c1 = arith.constant 1 : index
    %72 = memref.load %arg2[%c1] : memref<98xf32, #tpu.memory_space<smem>>
    %73 = vector.broadcast %72 : f32 to vector<4x1xf32>
    %74 = arith.mulf %73, %8 : vector<4x1xf32>
    %c50 = arith.constant 50 : index
    %75 = memref.load %arg2[%c50] : memref<98xf32, #tpu.memory_space<smem>>
    %76 = vector.broadcast %75 : f32 to vector<4x1xf32>
    %77 = arith.mulf %76, %9 : vector<4x1xf32>
    %78 = arith.addf %74, %77 : vector<4x1xf32>
    %79 = vector.broadcast %78 : vector<4x1xf32> to vector<4x256xf32>
    %80 = arith.mulf %79, %71 : vector<4x256xf32>
    %cst_14 = arith.constant 0.000000e+00 : f32
    %81 = vector.shape_cast %24 : vector<1x256xi1> to vector<1x256xi1>
    %82 = vector.broadcast %81 : vector<1x256xi1> to vector<4x256xi1>
    %83 = vector.broadcast %cst_14 : f32 to vector<4x256xf32>
    %84 = arith.select %82, %80, %83 : vector<4x256xi1>, vector<4x256xf32>
    %85 = arith.addf %70, %84 : vector<4x256xf32>
    %c1_i32_15 = arith.constant 1 : i32
    %86 = tpu.dynamic_rotate %55 by %c1_i32_15 dim 1 : vector<4x256xf32>, i32 -> vector<4x256xf32>
    %c2 = arith.constant 2 : index
    %87 = memref.load %arg2[%c2] : memref<98xf32, #tpu.memory_space<smem>>
    %88 = vector.broadcast %87 : f32 to vector<4x1xf32>
    %89 = arith.mulf %88, %8 : vector<4x1xf32>
    %c51 = arith.constant 51 : index
    %90 = memref.load %arg2[%c51] : memref<98xf32, #tpu.memory_space<smem>>
    %91 = vector.broadcast %90 : f32 to vector<4x1xf32>
    %92 = arith.mulf %91, %9 : vector<4x1xf32>
    %93 = arith.addf %89, %92 : vector<4x1xf32>
    %94 = vector.broadcast %93 : vector<4x1xf32> to vector<4x256xf32>
    %95 = arith.mulf %94, %86 : vector<4x256xf32>
    %cst_16 = arith.constant 0.000000e+00 : f32
    %96 = vector.shape_cast %29 : vector<1x256xi1> to vector<1x256xi1>
    %97 = vector.broadcast %96 : vector<1x256xi1> to vector<4x256xi1>
    %98 = vector.broadcast %cst_16 : f32 to vector<4x256xf32>
    %99 = arith.select %97, %95, %98 : vector<4x256xi1>, vector<4x256xf32>
    %100 = arith.addf %85, %99 : vector<4x256xf32>
    %c3 = arith.constant 3 : index
    %101 = memref.load %arg2[%c3] : memref<98xf32, #tpu.memory_space<smem>>
    %102 = vector.broadcast %101 : f32 to vector<4x1xf32>
    %103 = arith.mulf %102, %8 : vector<4x1xf32>
    %c52 = arith.constant 52 : index
    %104 = memref.load %arg2[%c52] : memref<98xf32, #tpu.memory_space<smem>>
    %105 = vector.broadcast %104 : f32 to vector<4x1xf32>
    %106 = arith.mulf %105, %9 : vector<4x1xf32>
    %107 = arith.addf %103, %106 : vector<4x1xf32>
    %108 = vector.broadcast %107 : vector<4x1xf32> to vector<4x256xf32>
    %109 = arith.mulf %108, %55 : vector<4x256xf32>
    %110 = arith.addf %100, %109 : vector<4x256xf32>
    %c255_i32 = arith.constant 255 : i32
    %111 = tpu.dynamic_rotate %55 by %c255_i32 dim 1 : vector<4x256xf32>, i32 -> vector<4x256xf32>
    %c4 = arith.constant 4 : index
    %112 = memref.load %arg2[%c4] : memref<98xf32, #tpu.memory_space<smem>>
    %113 = vector.broadcast %112 : f32 to vector<4x1xf32>
    %114 = arith.mulf %113, %8 : vector<4x1xf32>
    %c53 = arith.constant 53 : index
    %115 = memref.load %arg2[%c53] : memref<98xf32, #tpu.memory_space<smem>>
    %116 = vector.broadcast %115 : f32 to vector<4x1xf32>
    %117 = arith.mulf %116, %9 : vector<4x1xf32>
    %118 = arith.addf %114, %117 : vector<4x1xf32>
    %119 = vector.broadcast %118 : vector<4x1xf32> to vector<4x256xf32>
    %120 = arith.mulf %119, %111 : vector<4x256xf32>
    %cst_17 = arith.constant 0.000000e+00 : f32
    %121 = vector.shape_cast %34 : vector<1x256xi1> to vector<1x256xi1>
    %122 = vector.broadcast %121 : vector<1x256xi1> to vector<4x256xi1>
    %123 = vector.broadcast %cst_17 : f32 to vector<4x256xf32>
    %124 = arith.select %122, %120, %123 : vector<4x256xi1>, vector<4x256xf32>
    %125 = arith.addf %110, %124 : vector<4x256xf32>
    %c254_i32 = arith.constant 254 : i32
    %126 = tpu.dynamic_rotate %55 by %c254_i32 dim 1 : vector<4x256xf32>, i32 -> vector<4x256xf32>
    %c5 = arith.constant 5 : index
    %127 = memref.load %arg2[%c5] : memref<98xf32, #tpu.memory_space<smem>>
    %128 = vector.broadcast %127 : f32 to vector<4x1xf32>
    %129 = arith.mulf %128, %8 : vector<4x1xf32>
    %c54 = arith.constant 54 : index
    %130 = memref.load %arg2[%c54] : memref<98xf32, #tpu.memory_space<smem>>
    %131 = vector.broadcast %130 : f32 to vector<4x1xf32>
    %132 = arith.mulf %131, %9 : vector<4x1xf32>
    %133 = arith.addf %129, %132 : vector<4x1xf32>
    %134 = vector.broadcast %133 : vector<4x1xf32> to vector<4x256xf32>
    %135 = arith.mulf %134, %126 : vector<4x256xf32>
    %cst_18 = arith.constant 0.000000e+00 : f32
    %136 = vector.shape_cast %39 : vector<1x256xi1> to vector<1x256xi1>
    %137 = vector.broadcast %136 : vector<1x256xi1> to vector<4x256xi1>
    %138 = vector.broadcast %cst_18 : f32 to vector<4x256xf32>
    %139 = arith.select %137, %135, %138 : vector<4x256xi1>, vector<4x256xf32>
    %140 = arith.addf %125, %139 : vector<4x256xf32>
    %c253_i32 = arith.constant 253 : i32
    %141 = tpu.dynamic_rotate %55 by %c253_i32 dim 1 : vector<4x256xf32>, i32 -> vector<4x256xf32>
    %c6 = arith.constant 6 : index
    %142 = memref.load %arg2[%c6] : memref<98xf32, #tpu.memory_space<smem>>
    %143 = vector.broadcast %142 : f32 to vector<4x1xf32>
    %144 = arith.mulf %143, %8 : vector<4x1xf32>
    %c55 = arith.constant 55 : index
    %145 = memref.load %arg2[%c55] : memref<98xf32, #tpu.memory_space<smem>>
    %146 = vector.broadcast %145 : f32 to vector<4x1xf32>
    %147 = arith.mulf %146, %9 : vector<4x1xf32>
    %148 = arith.addf %144, %147 : vector<4x1xf32>
    %149 = vector.broadcast %148 : vector<4x1xf32> to vector<4x256xf32>
    %150 = arith.mulf %149, %141 : vector<4x256xf32>
    %cst_19 = arith.constant 0.000000e+00 : f32
    %151 = vector.shape_cast %44 : vector<1x256xi1> to vector<1x256xi1>
    %152 = vector.broadcast %151 : vector<1x256xi1> to vector<4x256xi1>
    %153 = vector.broadcast %cst_19 : f32 to vector<4x256xf32>
    %154 = arith.select %152, %150, %153 : vector<4x256xi1>, vector<4x256xf32>
    %155 = arith.addf %140, %154 : vector<4x256xf32>
    %c32_i32 = arith.constant 32 : i32
    %156 = tpu.dynamic_rotate %5 by %c32_i32 dim 1 : vector<4x256xf32>, i32 -> vector<4x256xf32>
    %c2_i32_20 = arith.constant 2 : i32
    %157 = vector.broadcast %c2_i32_20 : i32 to vector<1x256xi32>
    %158 = arith.cmpi sge, %14, %157 : vector<1x256xi32>
    %c17_i32_21 = arith.constant 17 : i32
    %159 = vector.broadcast %c17_i32_21 : i32 to vector<1x256xi32>
    %160 = arith.cmpi sle, %14, %159 : vector<1x256xi32>
    %161 = arith.andi %158, %160 : vector<1x256xi1>
    %cst_22 = arith.constant 0.000000e+00 : f32
    %162 = vector.shape_cast %161 : vector<1x256xi1> to vector<1x256xi1>
    %163 = vector.broadcast %162 : vector<1x256xi1> to vector<4x256xi1>
    %164 = vector.broadcast %cst_22 : f32 to vector<4x256xf32>
    %165 = arith.select %163, %156, %164 : vector<4x256xi1>, vector<4x256xf32>
    %c3_i32_23 = arith.constant 3 : i32
    %166 = tpu.dynamic_rotate %165 by %c3_i32_23 dim 1 : vector<4x256xf32>, i32 -> vector<4x256xf32>
    %c7 = arith.constant 7 : index
    %167 = memref.load %arg2[%c7] : memref<98xf32, #tpu.memory_space<smem>>
    %168 = vector.broadcast %167 : f32 to vector<4x1xf32>
    %169 = arith.mulf %168, %8 : vector<4x1xf32>
    %c56 = arith.constant 56 : index
    %170 = memref.load %arg2[%c56] : memref<98xf32, #tpu.memory_space<smem>>
    %171 = vector.broadcast %170 : f32 to vector<4x1xf32>
    %172 = arith.mulf %171, %9 : vector<4x1xf32>
    %173 = arith.addf %169, %172 : vector<4x1xf32>
    %174 = vector.broadcast %173 : vector<4x1xf32> to vector<4x256xf32>
    %175 = arith.mulf %174, %166 : vector<4x256xf32>
    %cst_24 = arith.constant 0.000000e+00 : f32
    %176 = vector.shape_cast %19 : vector<1x256xi1> to vector<1x256xi1>
    %177 = vector.broadcast %176 : vector<1x256xi1> to vector<4x256xi1>
    %178 = vector.broadcast %cst_24 : f32 to vector<4x256xf32>
    %179 = arith.select %177, %175, %178 : vector<4x256xi1>, vector<4x256xf32>
    %180 = arith.addf %155, %179 : vector<4x256xf32>
    %c2_i32_25 = arith.constant 2 : i32
    %181 = tpu.dynamic_rotate %165 by %c2_i32_25 dim 1 : vector<4x256xf32>, i32 -> vector<4x256xf32>
    %c8 = arith.constant 8 : index
    %182 = memref.load %arg2[%c8] : memref<98xf32, #tpu.memory_space<smem>>
    %183 = vector.broadcast %182 : f32 to vector<4x1xf32>
    %184 = arith.mulf %183, %8 : vector<4x1xf32>
    %c57 = arith.constant 57 : index
    %185 = memref.load %arg2[%c57] : memref<98xf32, #tpu.memory_space<smem>>
    %186 = vector.broadcast %185 : f32 to vector<4x1xf32>
    %187 = arith.mulf %186, %9 : vector<4x1xf32>
    %188 = arith.addf %184, %187 : vector<4x1xf32>
    %189 = vector.broadcast %188 : vector<4x1xf32> to vector<4x256xf32>
    %190 = arith.mulf %189, %181 : vector<4x256xf32>
    %cst_26 = arith.constant 0.000000e+00 : f32
    %191 = vector.shape_cast %24 : vector<1x256xi1> to vector<1x256xi1>
    %192 = vector.broadcast %191 : vector<1x256xi1> to vector<4x256xi1>
    %193 = vector.broadcast %cst_26 : f32 to vector<4x256xf32>
    %194 = arith.select %192, %190, %193 : vector<4x256xi1>, vector<4x256xf32>
    %195 = arith.addf %180, %194 : vector<4x256xf32>
    %c1_i32_27 = arith.constant 1 : i32
    %196 = tpu.dynamic_rotate %165 by %c1_i32_27 dim 1 : vector<4x256xf32>, i32 -> vector<4x256xf32>
    %c9 = arith.constant 9 : index
    %197 = memref.load %arg2[%c9] : memref<98xf32, #tpu.memory_space<smem>>
    %198 = vector.broadcast %197 : f32 to vector<4x1xf32>
    %199 = arith.mulf %198, %8 : vector<4x1xf32>
    %c58 = arith.constant 58 : index
    %200 = memref.load %arg2[%c58] : memref<98xf32, #tpu.memory_space<smem>>
    %201 = vector.broadcast %200 : f32 to vector<4x1xf32>
    %202 = arith.mulf %201, %9 : vector<4x1xf32>
    %203 = arith.addf %199, %202 : vector<4x1xf32>
    %204 = vector.broadcast %203 : vector<4x1xf32> to vector<4x256xf32>
    %205 = arith.mulf %204, %196 : vector<4x256xf32>
    %cst_28 = arith.constant 0.000000e+00 : f32
    %206 = vector.shape_cast %29 : vector<1x256xi1> to vector<1x256xi1>
    %207 = vector.broadcast %206 : vector<1x256xi1> to vector<4x256xi1>
    %208 = vector.broadcast %cst_28 : f32 to vector<4x256xf32>
    %209 = arith.select %207, %205, %208 : vector<4x256xi1>, vector<4x256xf32>
    %210 = arith.addf %195, %209 : vector<4x256xf32>
    %c10 = arith.constant 10 : index
    %211 = memref.load %arg2[%c10] : memref<98xf32, #tpu.memory_space<smem>>
    %212 = vector.broadcast %211 : f32 to vector<4x1xf32>
    %213 = arith.mulf %212, %8 : vector<4x1xf32>
    %c59 = arith.constant 59 : index
    %214 = memref.load %arg2[%c59] : memref<98xf32, #tpu.memory_space<smem>>
    %215 = vector.broadcast %214 : f32 to vector<4x1xf32>
    %216 = arith.mulf %215, %9 : vector<4x1xf32>
    %217 = arith.addf %213, %216 : vector<4x1xf32>
    %218 = vector.broadcast %217 : vector<4x1xf32> to vector<4x256xf32>
    %219 = arith.mulf %218, %165 : vector<4x256xf32>
    %220 = arith.addf %210, %219 : vector<4x256xf32>
    %c255_i32_29 = arith.constant 255 : i32
    %221 = tpu.dynamic_rotate %165 by %c255_i32_29 dim 1 : vector<4x256xf32>, i32 -> vector<4x256xf32>
    %c11 = arith.constant 11 : index
    %222 = memref.load %arg2[%c11] : memref<98xf32, #tpu.memory_space<smem>>
    %223 = vector.broadcast %222 : f32 to vector<4x1xf32>
    %224 = arith.mulf %223, %8 : vector<4x1xf32>
    %c60 = arith.constant 60 : index
    %225 = memref.load %arg2[%c60] : memref<98xf32, #tpu.memory_space<smem>>
    %226 = vector.broadcast %225 : f32 to vector<4x1xf32>
    %227 = arith.mulf %226, %9 : vector<4x1xf32>
    %228 = arith.addf %224, %227 : vector<4x1xf32>
    %229 = vector.broadcast %228 : vector<4x1xf32> to vector<4x256xf32>
    %230 = arith.mulf %229, %221 : vector<4x256xf32>
    %cst_30 = arith.constant 0.000000e+00 : f32
    %231 = vector.shape_cast %34 : vector<1x256xi1> to vector<1x256xi1>
    %232 = vector.broadcast %231 : vector<1x256xi1> to vector<4x256xi1>
    %233 = vector.broadcast %cst_30 : f32 to vector<4x256xf32>
    %234 = arith.select %232, %230, %233 : vector<4x256xi1>, vector<4x256xf32>
    %235 = arith.addf %220, %234 : vector<4x256xf32>
    %c254_i32_31 = arith.constant 254 : i32
    %236 = tpu.dynamic_rotate %165 by %c254_i32_31 dim 1 : vector<4x256xf32>, i32 -> vector<4x256xf32>
    %c12 = arith.constant 12 : index
    %237 = memref.load %arg2[%c12] : memref<98xf32, #tpu.memory_space<smem>>
    %238 = vector.broadcast %237 : f32 to vector<4x1xf32>
    %239 = arith.mulf %238, %8 : vector<4x1xf32>
    %c61 = arith.constant 61 : index
    %240 = memref.load %arg2[%c61] : memref<98xf32, #tpu.memory_space<smem>>
    %241 = vector.broadcast %240 : f32 to vector<4x1xf32>
    %242 = arith.mulf %241, %9 : vector<4x1xf32>
    %243 = arith.addf %239, %242 : vector<4x1xf32>
    %244 = vector.broadcast %243 : vector<4x1xf32> to vector<4x256xf32>
    %245 = arith.mulf %244, %236 : vector<4x256xf32>
    %cst_32 = arith.constant 0.000000e+00 : f32
    %246 = vector.shape_cast %39 : vector<1x256xi1> to vector<1x256xi1>
    %247 = vector.broadcast %246 : vector<1x256xi1> to vector<4x256xi1>
    %248 = vector.broadcast %cst_32 : f32 to vector<4x256xf32>
    %249 = arith.select %247, %245, %248 : vector<4x256xi1>, vector<4x256xf32>
    %250 = arith.addf %235, %249 : vector<4x256xf32>
    %c253_i32_33 = arith.constant 253 : i32
    %251 = tpu.dynamic_rotate %165 by %c253_i32_33 dim 1 : vector<4x256xf32>, i32 -> vector<4x256xf32>
    %c13 = arith.constant 13 : index
    %252 = memref.load %arg2[%c13] : memref<98xf32, #tpu.memory_space<smem>>
    %253 = vector.broadcast %252 : f32 to vector<4x1xf32>
    %254 = arith.mulf %253, %8 : vector<4x1xf32>
    %c62 = arith.constant 62 : index
    %255 = memref.load %arg2[%c62] : memref<98xf32, #tpu.memory_space<smem>>
    %256 = vector.broadcast %255 : f32 to vector<4x1xf32>
    %257 = arith.mulf %256, %9 : vector<4x1xf32>
    %258 = arith.addf %254, %257 : vector<4x1xf32>
    %259 = vector.broadcast %258 : vector<4x1xf32> to vector<4x256xf32>
    %260 = arith.mulf %259, %251 : vector<4x256xf32>
    %cst_34 = arith.constant 0.000000e+00 : f32
    %261 = vector.shape_cast %44 : vector<1x256xi1> to vector<1x256xi1>
    %262 = vector.broadcast %261 : vector<1x256xi1> to vector<4x256xi1>
    %263 = vector.broadcast %cst_34 : f32 to vector<4x256xf32>
    %264 = arith.select %262, %260, %263 : vector<4x256xi1>, vector<4x256xf32>
    %265 = arith.addf %250, %264 : vector<4x256xf32>
    %c16_i32_35 = arith.constant 16 : i32
    %266 = tpu.dynamic_rotate %5 by %c16_i32_35 dim 1 : vector<4x256xf32>, i32 -> vector<4x256xf32>
    %c1_i32_36 = arith.constant 1 : i32
    %267 = vector.broadcast %c1_i32_36 : i32 to vector<1x256xi32>
    %268 = arith.cmpi sge, %14, %267 : vector<1x256xi32>
    %c16_i32_37 = arith.constant 16 : i32
    %269 = vector.broadcast %c16_i32_37 : i32 to vector<1x256xi32>
    %270 = arith.cmpi sle, %14, %269 : vector<1x256xi32>
    %271 = arith.andi %268, %270 : vector<1x256xi1>
    %cst_38 = arith.constant 0.000000e+00 : f32
    %272 = vector.shape_cast %271 : vector<1x256xi1> to vector<1x256xi1>
    %273 = vector.broadcast %272 : vector<1x256xi1> to vector<4x256xi1>
    %274 = vector.broadcast %cst_38 : f32 to vector<4x256xf32>
    %275 = arith.select %273, %266, %274 : vector<4x256xi1>, vector<4x256xf32>
    %c3_i32_39 = arith.constant 3 : i32
    %276 = tpu.dynamic_rotate %275 by %c3_i32_39 dim 1 : vector<4x256xf32>, i32 -> vector<4x256xf32>
    %c14 = arith.constant 14 : index
    %277 = memref.load %arg2[%c14] : memref<98xf32, #tpu.memory_space<smem>>
    %278 = vector.broadcast %277 : f32 to vector<4x1xf32>
    %279 = arith.mulf %278, %8 : vector<4x1xf32>
    %c63 = arith.constant 63 : index
    %280 = memref.load %arg2[%c63] : memref<98xf32, #tpu.memory_space<smem>>
    %281 = vector.broadcast %280 : f32 to vector<4x1xf32>
    %282 = arith.mulf %281, %9 : vector<4x1xf32>
    %283 = arith.addf %279, %282 : vector<4x1xf32>
    %284 = vector.broadcast %283 : vector<4x1xf32> to vector<4x256xf32>
    %285 = arith.mulf %284, %276 : vector<4x256xf32>
    %cst_40 = arith.constant 0.000000e+00 : f32
    %286 = vector.shape_cast %19 : vector<1x256xi1> to vector<1x256xi1>
    %287 = vector.broadcast %286 : vector<1x256xi1> to vector<4x256xi1>
    %288 = vector.broadcast %cst_40 : f32 to vector<4x256xf32>
    %289 = arith.select %287, %285, %288 : vector<4x256xi1>, vector<4x256xf32>
    %290 = arith.addf %265, %289 : vector<4x256xf32>
    %c2_i32_41 = arith.constant 2 : i32
    %291 = tpu.dynamic_rotate %275 by %c2_i32_41 dim 1 : vector<4x256xf32>, i32 -> vector<4x256xf32>
    %c15 = arith.constant 15 : index
    %292 = memref.load %arg2[%c15] : memref<98xf32, #tpu.memory_space<smem>>
    %293 = vector.broadcast %292 : f32 to vector<4x1xf32>
    %294 = arith.mulf %293, %8 : vector<4x1xf32>
    %c64 = arith.constant 64 : index
    %295 = memref.load %arg2[%c64] : memref<98xf32, #tpu.memory_space<smem>>
    %296 = vector.broadcast %295 : f32 to vector<4x1xf32>
    %297 = arith.mulf %296, %9 : vector<4x1xf32>
    %298 = arith.addf %294, %297 : vector<4x1xf32>
    %299 = vector.broadcast %298 : vector<4x1xf32> to vector<4x256xf32>
    %300 = arith.mulf %299, %291 : vector<4x256xf32>
    %cst_42 = arith.constant 0.000000e+00 : f32
    %301 = vector.shape_cast %24 : vector<1x256xi1> to vector<1x256xi1>
    %302 = vector.broadcast %301 : vector<1x256xi1> to vector<4x256xi1>
    %303 = vector.broadcast %cst_42 : f32 to vector<4x256xf32>
    %304 = arith.select %302, %300, %303 : vector<4x256xi1>, vector<4x256xf32>
    %305 = arith.addf %290, %304 : vector<4x256xf32>
    %c1_i32_43 = arith.constant 1 : i32
    %306 = tpu.dynamic_rotate %275 by %c1_i32_43 dim 1 : vector<4x256xf32>, i32 -> vector<4x256xf32>
    %c16 = arith.constant 16 : index
    %307 = memref.load %arg2[%c16] : memref<98xf32, #tpu.memory_space<smem>>
    %308 = vector.broadcast %307 : f32 to vector<4x1xf32>
    %309 = arith.mulf %308, %8 : vector<4x1xf32>
    %c65 = arith.constant 65 : index
    %310 = memref.load %arg2[%c65] : memref<98xf32, #tpu.memory_space<smem>>
    %311 = vector.broadcast %310 : f32 to vector<4x1xf32>
    %312 = arith.mulf %311, %9 : vector<4x1xf32>
    %313 = arith.addf %309, %312 : vector<4x1xf32>
    %314 = vector.broadcast %313 : vector<4x1xf32> to vector<4x256xf32>
    %315 = arith.mulf %314, %306 : vector<4x256xf32>
    %cst_44 = arith.constant 0.000000e+00 : f32
    %316 = vector.shape_cast %29 : vector<1x256xi1> to vector<1x256xi1>
    %317 = vector.broadcast %316 : vector<1x256xi1> to vector<4x256xi1>
    %318 = vector.broadcast %cst_44 : f32 to vector<4x256xf32>
    %319 = arith.select %317, %315, %318 : vector<4x256xi1>, vector<4x256xf32>
    %320 = arith.addf %305, %319 : vector<4x256xf32>
    %c17 = arith.constant 17 : index
    %321 = memref.load %arg2[%c17] : memref<98xf32, #tpu.memory_space<smem>>
    %322 = vector.broadcast %321 : f32 to vector<4x1xf32>
    %323 = arith.mulf %322, %8 : vector<4x1xf32>
    %c66 = arith.constant 66 : index
    %324 = memref.load %arg2[%c66] : memref<98xf32, #tpu.memory_space<smem>>
    %325 = vector.broadcast %324 : f32 to vector<4x1xf32>
    %326 = arith.mulf %325, %9 : vector<4x1xf32>
    %327 = arith.addf %323, %326 : vector<4x1xf32>
    %328 = vector.broadcast %327 : vector<4x1xf32> to vector<4x256xf32>
    %329 = arith.mulf %328, %275 : vector<4x256xf32>
    %330 = arith.addf %320, %329 : vector<4x256xf32>
    %c255_i32_45 = arith.constant 255 : i32
    %331 = tpu.dynamic_rotate %275 by %c255_i32_45 dim 1 : vector<4x256xf32>, i32 -> vector<4x256xf32>
    %c18 = arith.constant 18 : index
    %332 = memref.load %arg2[%c18] : memref<98xf32, #tpu.memory_space<smem>>
    %333 = vector.broadcast %332 : f32 to vector<4x1xf32>
    %334 = arith.mulf %333, %8 : vector<4x1xf32>
    %c67 = arith.constant 67 : index
    %335 = memref.load %arg2[%c67] : memref<98xf32, #tpu.memory_space<smem>>
    %336 = vector.broadcast %335 : f32 to vector<4x1xf32>
    %337 = arith.mulf %336, %9 : vector<4x1xf32>
    %338 = arith.addf %334, %337 : vector<4x1xf32>
    %339 = vector.broadcast %338 : vector<4x1xf32> to vector<4x256xf32>
    %340 = arith.mulf %339, %331 : vector<4x256xf32>
    %cst_46 = arith.constant 0.000000e+00 : f32
    %341 = vector.shape_cast %34 : vector<1x256xi1> to vector<1x256xi1>
    %342 = vector.broadcast %341 : vector<1x256xi1> to vector<4x256xi1>
    %343 = vector.broadcast %cst_46 : f32 to vector<4x256xf32>
    %344 = arith.select %342, %340, %343 : vector<4x256xi1>, vector<4x256xf32>
    %345 = arith.addf %330, %344 : vector<4x256xf32>
    %c254_i32_47 = arith.constant 254 : i32
    %346 = tpu.dynamic_rotate %275 by %c254_i32_47 dim 1 : vector<4x256xf32>, i32 -> vector<4x256xf32>
    %c19 = arith.constant 19 : index
    %347 = memref.load %arg2[%c19] : memref<98xf32, #tpu.memory_space<smem>>
    %348 = vector.broadcast %347 : f32 to vector<4x1xf32>
    %349 = arith.mulf %348, %8 : vector<4x1xf32>
    %c68 = arith.constant 68 : index
    %350 = memref.load %arg2[%c68] : memref<98xf32, #tpu.memory_space<smem>>
    %351 = vector.broadcast %350 : f32 to vector<4x1xf32>
    %352 = arith.mulf %351, %9 : vector<4x1xf32>
    %353 = arith.addf %349, %352 : vector<4x1xf32>
    %354 = vector.broadcast %353 : vector<4x1xf32> to vector<4x256xf32>
    %355 = arith.mulf %354, %346 : vector<4x256xf32>
    %cst_48 = arith.constant 0.000000e+00 : f32
    %356 = vector.shape_cast %39 : vector<1x256xi1> to vector<1x256xi1>
    %357 = vector.broadcast %356 : vector<1x256xi1> to vector<4x256xi1>
    %358 = vector.broadcast %cst_48 : f32 to vector<4x256xf32>
    %359 = arith.select %357, %355, %358 : vector<4x256xi1>, vector<4x256xf32>
    %360 = arith.addf %345, %359 : vector<4x256xf32>
    %c253_i32_49 = arith.constant 253 : i32
    %361 = tpu.dynamic_rotate %275 by %c253_i32_49 dim 1 : vector<4x256xf32>, i32 -> vector<4x256xf32>
    %c20 = arith.constant 20 : index
    %362 = memref.load %arg2[%c20] : memref<98xf32, #tpu.memory_space<smem>>
    %363 = vector.broadcast %362 : f32 to vector<4x1xf32>
    %364 = arith.mulf %363, %8 : vector<4x1xf32>
    %c69 = arith.constant 69 : index
    %365 = memref.load %arg2[%c69] : memref<98xf32, #tpu.memory_space<smem>>
    %366 = vector.broadcast %365 : f32 to vector<4x1xf32>
    %367 = arith.mulf %366, %9 : vector<4x1xf32>
    %368 = arith.addf %364, %367 : vector<4x1xf32>
    %369 = vector.broadcast %368 : vector<4x1xf32> to vector<4x256xf32>
    %370 = arith.mulf %369, %361 : vector<4x256xf32>
    %cst_50 = arith.constant 0.000000e+00 : f32
    %371 = vector.shape_cast %44 : vector<1x256xi1> to vector<1x256xi1>
    %372 = vector.broadcast %371 : vector<1x256xi1> to vector<4x256xi1>
    %373 = vector.broadcast %cst_50 : f32 to vector<4x256xf32>
    %374 = arith.select %372, %370, %373 : vector<4x256xi1>, vector<4x256xf32>
    %375 = arith.addf %360, %374 : vector<4x256xf32>
    %c3_i32_51 = arith.constant 3 : i32
    %376 = tpu.dynamic_rotate %5 by %c3_i32_51 dim 1 : vector<4x256xf32>, i32 -> vector<4x256xf32>
    %c21 = arith.constant 21 : index
    %377 = memref.load %arg2[%c21] : memref<98xf32, #tpu.memory_space<smem>>
    %378 = vector.broadcast %377 : f32 to vector<4x1xf32>
    %379 = arith.mulf %378, %8 : vector<4x1xf32>
    %c70 = arith.constant 70 : index
    %380 = memref.load %arg2[%c70] : memref<98xf32, #tpu.memory_space<smem>>
    %381 = vector.broadcast %380 : f32 to vector<4x1xf32>
    %382 = arith.mulf %381, %9 : vector<4x1xf32>
    %383 = arith.addf %379, %382 : vector<4x1xf32>
    %384 = vector.broadcast %383 : vector<4x1xf32> to vector<4x256xf32>
    %385 = arith.mulf %384, %376 : vector<4x256xf32>
    %cst_52 = arith.constant 0.000000e+00 : f32
    %386 = vector.shape_cast %19 : vector<1x256xi1> to vector<1x256xi1>
    %387 = vector.broadcast %386 : vector<1x256xi1> to vector<4x256xi1>
    %388 = vector.broadcast %cst_52 : f32 to vector<4x256xf32>
    %389 = arith.select %387, %385, %388 : vector<4x256xi1>, vector<4x256xf32>
    %390 = arith.addf %375, %389 : vector<4x256xf32>
    %c2_i32_53 = arith.constant 2 : i32
    %391 = tpu.dynamic_rotate %5 by %c2_i32_53 dim 1 : vector<4x256xf32>, i32 -> vector<4x256xf32>
    %c22 = arith.constant 22 : index
    %392 = memref.load %arg2[%c22] : memref<98xf32, #tpu.memory_space<smem>>
    %393 = vector.broadcast %392 : f32 to vector<4x1xf32>
    %394 = arith.mulf %393, %8 : vector<4x1xf32>
    %c71 = arith.constant 71 : index
    %395 = memref.load %arg2[%c71] : memref<98xf32, #tpu.memory_space<smem>>
    %396 = vector.broadcast %395 : f32 to vector<4x1xf32>
    %397 = arith.mulf %396, %9 : vector<4x1xf32>
    %398 = arith.addf %394, %397 : vector<4x1xf32>
    %399 = vector.broadcast %398 : vector<4x1xf32> to vector<4x256xf32>
    %400 = arith.mulf %399, %391 : vector<4x256xf32>
    %cst_54 = arith.constant 0.000000e+00 : f32
    %401 = vector.shape_cast %24 : vector<1x256xi1> to vector<1x256xi1>
    %402 = vector.broadcast %401 : vector<1x256xi1> to vector<4x256xi1>
    %403 = vector.broadcast %cst_54 : f32 to vector<4x256xf32>
    %404 = arith.select %402, %400, %403 : vector<4x256xi1>, vector<4x256xf32>
    %405 = arith.addf %390, %404 : vector<4x256xf32>
    %c1_i32_55 = arith.constant 1 : i32
    %406 = tpu.dynamic_rotate %5 by %c1_i32_55 dim 1 : vector<4x256xf32>, i32 -> vector<4x256xf32>
    %c23 = arith.constant 23 : index
    %407 = memref.load %arg2[%c23] : memref<98xf32, #tpu.memory_space<smem>>
    %408 = vector.broadcast %407 : f32 to vector<4x1xf32>
    %409 = arith.mulf %408, %8 : vector<4x1xf32>
    %c72 = arith.constant 72 : index
    %410 = memref.load %arg2[%c72] : memref<98xf32, #tpu.memory_space<smem>>
    %411 = vector.broadcast %410 : f32 to vector<4x1xf32>
    %412 = arith.mulf %411, %9 : vector<4x1xf32>
    %413 = arith.addf %409, %412 : vector<4x1xf32>
    %414 = vector.broadcast %413 : vector<4x1xf32> to vector<4x256xf32>
    %415 = arith.mulf %414, %406 : vector<4x256xf32>
    %cst_56 = arith.constant 0.000000e+00 : f32
    %416 = vector.shape_cast %29 : vector<1x256xi1> to vector<1x256xi1>
    %417 = vector.broadcast %416 : vector<1x256xi1> to vector<4x256xi1>
    %418 = vector.broadcast %cst_56 : f32 to vector<4x256xf32>
    %419 = arith.select %417, %415, %418 : vector<4x256xi1>, vector<4x256xf32>
    %420 = arith.addf %405, %419 : vector<4x256xf32>
    %c24 = arith.constant 24 : index
    %421 = memref.load %arg2[%c24] : memref<98xf32, #tpu.memory_space<smem>>
    %422 = vector.broadcast %421 : f32 to vector<4x1xf32>
    %423 = arith.mulf %422, %8 : vector<4x1xf32>
    %c73 = arith.constant 73 : index
    %424 = memref.load %arg2[%c73] : memref<98xf32, #tpu.memory_space<smem>>
    %425 = vector.broadcast %424 : f32 to vector<4x1xf32>
    %426 = arith.mulf %425, %9 : vector<4x1xf32>
    %427 = arith.addf %423, %426 : vector<4x1xf32>
    %428 = vector.broadcast %427 : vector<4x1xf32> to vector<4x256xf32>
    %429 = arith.mulf %428, %5 : vector<4x256xf32>
    %430 = arith.addf %420, %429 : vector<4x256xf32>
    %c255_i32_57 = arith.constant 255 : i32
    %431 = tpu.dynamic_rotate %5 by %c255_i32_57 dim 1 : vector<4x256xf32>, i32 -> vector<4x256xf32>
    %c25 = arith.constant 25 : index
    %432 = memref.load %arg2[%c25] : memref<98xf32, #tpu.memory_space<smem>>
    %433 = vector.broadcast %432 : f32 to vector<4x1xf32>
    %434 = arith.mulf %433, %8 : vector<4x1xf32>
    %c74 = arith.constant 74 : index
    %435 = memref.load %arg2[%c74] : memref<98xf32, #tpu.memory_space<smem>>
    %436 = vector.broadcast %435 : f32 to vector<4x1xf32>
    %437 = arith.mulf %436, %9 : vector<4x1xf32>
    %438 = arith.addf %434, %437 : vector<4x1xf32>
    %439 = vector.broadcast %438 : vector<4x1xf32> to vector<4x256xf32>
    %440 = arith.mulf %439, %431 : vector<4x256xf32>
    %cst_58 = arith.constant 0.000000e+00 : f32
    %441 = vector.shape_cast %34 : vector<1x256xi1> to vector<1x256xi1>
    %442 = vector.broadcast %441 : vector<1x256xi1> to vector<4x256xi1>
    %443 = vector.broadcast %cst_58 : f32 to vector<4x256xf32>
    %444 = arith.select %442, %440, %443 : vector<4x256xi1>, vector<4x256xf32>
    %445 = arith.addf %430, %444 : vector<4x256xf32>
    %c254_i32_59 = arith.constant 254 : i32
    %446 = tpu.dynamic_rotate %5 by %c254_i32_59 dim 1 : vector<4x256xf32>, i32 -> vector<4x256xf32>
    %c26 = arith.constant 26 : index
    %447 = memref.load %arg2[%c26] : memref<98xf32, #tpu.memory_space<smem>>
    %448 = vector.broadcast %447 : f32 to vector<4x1xf32>
    %449 = arith.mulf %448, %8 : vector<4x1xf32>
    %c75 = arith.constant 75 : index
    %450 = memref.load %arg2[%c75] : memref<98xf32, #tpu.memory_space<smem>>
    %451 = vector.broadcast %450 : f32 to vector<4x1xf32>
    %452 = arith.mulf %451, %9 : vector<4x1xf32>
    %453 = arith.addf %449, %452 : vector<4x1xf32>
    %454 = vector.broadcast %453 : vector<4x1xf32> to vector<4x256xf32>
    %455 = arith.mulf %454, %446 : vector<4x256xf32>
    %cst_60 = arith.constant 0.000000e+00 : f32
    %456 = vector.shape_cast %39 : vector<1x256xi1> to vector<1x256xi1>
    %457 = vector.broadcast %456 : vector<1x256xi1> to vector<4x256xi1>
    %458 = vector.broadcast %cst_60 : f32 to vector<4x256xf32>
    %459 = arith.select %457, %455, %458 : vector<4x256xi1>, vector<4x256xf32>
    %460 = arith.addf %445, %459 : vector<4x256xf32>
    %c253_i32_61 = arith.constant 253 : i32
    %461 = tpu.dynamic_rotate %5 by %c253_i32_61 dim 1 : vector<4x256xf32>, i32 -> vector<4x256xf32>
    %c27 = arith.constant 27 : index
    %462 = memref.load %arg2[%c27] : memref<98xf32, #tpu.memory_space<smem>>
    %463 = vector.broadcast %462 : f32 to vector<4x1xf32>
    %464 = arith.mulf %463, %8 : vector<4x1xf32>
    %c76 = arith.constant 76 : index
    %465 = memref.load %arg2[%c76] : memref<98xf32, #tpu.memory_space<smem>>
    %466 = vector.broadcast %465 : f32 to vector<4x1xf32>
    %467 = arith.mulf %466, %9 : vector<4x1xf32>
    %468 = arith.addf %464, %467 : vector<4x1xf32>
    %469 = vector.broadcast %468 : vector<4x1xf32> to vector<4x256xf32>
    %470 = arith.mulf %469, %461 : vector<4x256xf32>
    %cst_62 = arith.constant 0.000000e+00 : f32
    %471 = vector.shape_cast %44 : vector<1x256xi1> to vector<1x256xi1>
    %472 = vector.broadcast %471 : vector<1x256xi1> to vector<4x256xi1>
    %473 = vector.broadcast %cst_62 : f32 to vector<4x256xf32>
    %474 = arith.select %472, %470, %473 : vector<4x256xi1>, vector<4x256xf32>
    %475 = arith.addf %460, %474 : vector<4x256xf32>
    %c240_i32 = arith.constant 240 : i32
    %476 = tpu.dynamic_rotate %5 by %c240_i32 dim 1 : vector<4x256xf32>, i32 -> vector<4x256xf32>
    %c-1_i32_63 = arith.constant -1 : i32
    %477 = vector.broadcast %c-1_i32_63 : i32 to vector<1x256xi32>
    %478 = arith.cmpi sge, %14, %477 : vector<1x256xi32>
    %c14_i32_64 = arith.constant 14 : i32
    %479 = vector.broadcast %c14_i32_64 : i32 to vector<1x256xi32>
    %480 = arith.cmpi sle, %14, %479 : vector<1x256xi32>
    %481 = arith.andi %478, %480 : vector<1x256xi1>
    %cst_65 = arith.constant 0.000000e+00 : f32
    %482 = vector.shape_cast %481 : vector<1x256xi1> to vector<1x256xi1>
    %483 = vector.broadcast %482 : vector<1x256xi1> to vector<4x256xi1>
    %484 = vector.broadcast %cst_65 : f32 to vector<4x256xf32>
    %485 = arith.select %483, %476, %484 : vector<4x256xi1>, vector<4x256xf32>
    %c3_i32_66 = arith.constant 3 : i32
    %486 = tpu.dynamic_rotate %485 by %c3_i32_66 dim 1 : vector<4x256xf32>, i32 -> vector<4x256xf32>
    %c28 = arith.constant 28 : index
    %487 = memref.load %arg2[%c28] : memref<98xf32, #tpu.memory_space<smem>>
    %488 = vector.broadcast %487 : f32 to vector<4x1xf32>
    %489 = arith.mulf %488, %8 : vector<4x1xf32>
    %c77 = arith.constant 77 : index
    %490 = memref.load %arg2[%c77] : memref<98xf32, #tpu.memory_space<smem>>
    %491 = vector.broadcast %490 : f32 to vector<4x1xf32>
    %492 = arith.mulf %491, %9 : vector<4x1xf32>
    %493 = arith.addf %489, %492 : vector<4x1xf32>
    %494 = vector.broadcast %493 : vector<4x1xf32> to vector<4x256xf32>
    %495 = arith.mulf %494, %486 : vector<4x256xf32>
    %cst_67 = arith.constant 0.000000e+00 : f32
    %496 = vector.shape_cast %19 : vector<1x256xi1> to vector<1x256xi1>
    %497 = vector.broadcast %496 : vector<1x256xi1> to vector<4x256xi1>
    %498 = vector.broadcast %cst_67 : f32 to vector<4x256xf32>
    %499 = arith.select %497, %495, %498 : vector<4x256xi1>, vector<4x256xf32>
    %500 = arith.addf %475, %499 : vector<4x256xf32>
    %c2_i32_68 = arith.constant 2 : i32
    %501 = tpu.dynamic_rotate %485 by %c2_i32_68 dim 1 : vector<4x256xf32>, i32 -> vector<4x256xf32>
    %c29 = arith.constant 29 : index
    %502 = memref.load %arg2[%c29] : memref<98xf32, #tpu.memory_space<smem>>
    %503 = vector.broadcast %502 : f32 to vector<4x1xf32>
    %504 = arith.mulf %503, %8 : vector<4x1xf32>
    %c78 = arith.constant 78 : index
    %505 = memref.load %arg2[%c78] : memref<98xf32, #tpu.memory_space<smem>>
    %506 = vector.broadcast %505 : f32 to vector<4x1xf32>
    %507 = arith.mulf %506, %9 : vector<4x1xf32>
    %508 = arith.addf %504, %507 : vector<4x1xf32>
    %509 = vector.broadcast %508 : vector<4x1xf32> to vector<4x256xf32>
    %510 = arith.mulf %509, %501 : vector<4x256xf32>
    %cst_69 = arith.constant 0.000000e+00 : f32
    %511 = vector.shape_cast %24 : vector<1x256xi1> to vector<1x256xi1>
    %512 = vector.broadcast %511 : vector<1x256xi1> to vector<4x256xi1>
    %513 = vector.broadcast %cst_69 : f32 to vector<4x256xf32>
    %514 = arith.select %512, %510, %513 : vector<4x256xi1>, vector<4x256xf32>
    %515 = arith.addf %500, %514 : vector<4x256xf32>
    %c1_i32_70 = arith.constant 1 : i32
    %516 = tpu.dynamic_rotate %485 by %c1_i32_70 dim 1 : vector<4x256xf32>, i32 -> vector<4x256xf32>
    %c30 = arith.constant 30 : index
    %517 = memref.load %arg2[%c30] : memref<98xf32, #tpu.memory_space<smem>>
    %518 = vector.broadcast %517 : f32 to vector<4x1xf32>
    %519 = arith.mulf %518, %8 : vector<4x1xf32>
    %c79 = arith.constant 79 : index
    %520 = memref.load %arg2[%c79] : memref<98xf32, #tpu.memory_space<smem>>
    %521 = vector.broadcast %520 : f32 to vector<4x1xf32>
    %522 = arith.mulf %521, %9 : vector<4x1xf32>
    %523 = arith.addf %519, %522 : vector<4x1xf32>
    %524 = vector.broadcast %523 : vector<4x1xf32> to vector<4x256xf32>
    %525 = arith.mulf %524, %516 : vector<4x256xf32>
    %cst_71 = arith.constant 0.000000e+00 : f32
    %526 = vector.shape_cast %29 : vector<1x256xi1> to vector<1x256xi1>
    %527 = vector.broadcast %526 : vector<1x256xi1> to vector<4x256xi1>
    %528 = vector.broadcast %cst_71 : f32 to vector<4x256xf32>
    %529 = arith.select %527, %525, %528 : vector<4x256xi1>, vector<4x256xf32>
    %530 = arith.addf %515, %529 : vector<4x256xf32>
    %c31 = arith.constant 31 : index
    %531 = memref.load %arg2[%c31] : memref<98xf32, #tpu.memory_space<smem>>
    %532 = vector.broadcast %531 : f32 to vector<4x1xf32>
    %533 = arith.mulf %532, %8 : vector<4x1xf32>
    %c80 = arith.constant 80 : index
    %534 = memref.load %arg2[%c80] : memref<98xf32, #tpu.memory_space<smem>>
    %535 = vector.broadcast %534 : f32 to vector<4x1xf32>
    %536 = arith.mulf %535, %9 : vector<4x1xf32>
    %537 = arith.addf %533, %536 : vector<4x1xf32>
    %538 = vector.broadcast %537 : vector<4x1xf32> to vector<4x256xf32>
    %539 = arith.mulf %538, %485 : vector<4x256xf32>
    %540 = arith.addf %530, %539 : vector<4x256xf32>
    %c255_i32_72 = arith.constant 255 : i32
    %541 = tpu.dynamic_rotate %485 by %c255_i32_72 dim 1 : vector<4x256xf32>, i32 -> vector<4x256xf32>
    %c32 = arith.constant 32 : index
    %542 = memref.load %arg2[%c32] : memref<98xf32, #tpu.memory_space<smem>>
    %543 = vector.broadcast %542 : f32 to vector<4x1xf32>
    %544 = arith.mulf %543, %8 : vector<4x1xf32>
    %c81 = arith.constant 81 : index
    %545 = memref.load %arg2[%c81] : memref<98xf32, #tpu.memory_space<smem>>
    %546 = vector.broadcast %545 : f32 to vector<4x1xf32>
    %547 = arith.mulf %546, %9 : vector<4x1xf32>
    %548 = arith.addf %544, %547 : vector<4x1xf32>
    %549 = vector.broadcast %548 : vector<4x1xf32> to vector<4x256xf32>
    %550 = arith.mulf %549, %541 : vector<4x256xf32>
    %cst_73 = arith.constant 0.000000e+00 : f32
    %551 = vector.shape_cast %34 : vector<1x256xi1> to vector<1x256xi1>
    %552 = vector.broadcast %551 : vector<1x256xi1> to vector<4x256xi1>
    %553 = vector.broadcast %cst_73 : f32 to vector<4x256xf32>
    %554 = arith.select %552, %550, %553 : vector<4x256xi1>, vector<4x256xf32>
    %555 = arith.addf %540, %554 : vector<4x256xf32>
    %c254_i32_74 = arith.constant 254 : i32
    %556 = tpu.dynamic_rotate %485 by %c254_i32_74 dim 1 : vector<4x256xf32>, i32 -> vector<4x256xf32>
    %c33 = arith.constant 33 : index
    %557 = memref.load %arg2[%c33] : memref<98xf32, #tpu.memory_space<smem>>
    %558 = vector.broadcast %557 : f32 to vector<4x1xf32>
    %559 = arith.mulf %558, %8 : vector<4x1xf32>
    %c82 = arith.constant 82 : index
    %560 = memref.load %arg2[%c82] : memref<98xf32, #tpu.memory_space<smem>>
    %561 = vector.broadcast %560 : f32 to vector<4x1xf32>
    %562 = arith.mulf %561, %9 : vector<4x1xf32>
    %563 = arith.addf %559, %562 : vector<4x1xf32>
    %564 = vector.broadcast %563 : vector<4x1xf32> to vector<4x256xf32>
    %565 = arith.mulf %564, %556 : vector<4x256xf32>
    %cst_75 = arith.constant 0.000000e+00 : f32
    %566 = vector.shape_cast %39 : vector<1x256xi1> to vector<1x256xi1>
    %567 = vector.broadcast %566 : vector<1x256xi1> to vector<4x256xi1>
    %568 = vector.broadcast %cst_75 : f32 to vector<4x256xf32>
    %569 = arith.select %567, %565, %568 : vector<4x256xi1>, vector<4x256xf32>
    %570 = arith.addf %555, %569 : vector<4x256xf32>
    %c253_i32_76 = arith.constant 253 : i32
    %571 = tpu.dynamic_rotate %485 by %c253_i32_76 dim 1 : vector<4x256xf32>, i32 -> vector<4x256xf32>
    %c34 = arith.constant 34 : index
    %572 = memref.load %arg2[%c34] : memref<98xf32, #tpu.memory_space<smem>>
    %573 = vector.broadcast %572 : f32 to vector<4x1xf32>
    %574 = arith.mulf %573, %8 : vector<4x1xf32>
    %c83 = arith.constant 83 : index
    %575 = memref.load %arg2[%c83] : memref<98xf32, #tpu.memory_space<smem>>
    %576 = vector.broadcast %575 : f32 to vector<4x1xf32>
    %577 = arith.mulf %576, %9 : vector<4x1xf32>
    %578 = arith.addf %574, %577 : vector<4x1xf32>
    %579 = vector.broadcast %578 : vector<4x1xf32> to vector<4x256xf32>
    %580 = arith.mulf %579, %571 : vector<4x256xf32>
    %cst_77 = arith.constant 0.000000e+00 : f32
    %581 = vector.shape_cast %44 : vector<1x256xi1> to vector<1x256xi1>
    %582 = vector.broadcast %581 : vector<1x256xi1> to vector<4x256xi1>
    %583 = vector.broadcast %cst_77 : f32 to vector<4x256xf32>
    %584 = arith.select %582, %580, %583 : vector<4x256xi1>, vector<4x256xf32>
    %585 = arith.addf %570, %584 : vector<4x256xf32>
    %c224_i32 = arith.constant 224 : i32
    %586 = tpu.dynamic_rotate %5 by %c224_i32 dim 1 : vector<4x256xf32>, i32 -> vector<4x256xf32>
    %c-2_i32_78 = arith.constant -2 : i32
    %587 = vector.broadcast %c-2_i32_78 : i32 to vector<1x256xi32>
    %588 = arith.cmpi sge, %14, %587 : vector<1x256xi32>
    %c13_i32_79 = arith.constant 13 : i32
    %589 = vector.broadcast %c13_i32_79 : i32 to vector<1x256xi32>
    %590 = arith.cmpi sle, %14, %589 : vector<1x256xi32>
    %591 = arith.andi %588, %590 : vector<1x256xi1>
    %cst_80 = arith.constant 0.000000e+00 : f32
    %592 = vector.shape_cast %591 : vector<1x256xi1> to vector<1x256xi1>
    %593 = vector.broadcast %592 : vector<1x256xi1> to vector<4x256xi1>
    %594 = vector.broadcast %cst_80 : f32 to vector<4x256xf32>
    %595 = arith.select %593, %586, %594 : vector<4x256xi1>, vector<4x256xf32>
    %c3_i32_81 = arith.constant 3 : i32
    %596 = tpu.dynamic_rotate %595 by %c3_i32_81 dim 1 : vector<4x256xf32>, i32 -> vector<4x256xf32>
    %c35 = arith.constant 35 : index
    %597 = memref.load %arg2[%c35] : memref<98xf32, #tpu.memory_space<smem>>
    %598 = vector.broadcast %597 : f32 to vector<4x1xf32>
    %599 = arith.mulf %598, %8 : vector<4x1xf32>
    %c84 = arith.constant 84 : index
    %600 = memref.load %arg2[%c84] : memref<98xf32, #tpu.memory_space<smem>>
    %601 = vector.broadcast %600 : f32 to vector<4x1xf32>
    %602 = arith.mulf %601, %9 : vector<4x1xf32>
    %603 = arith.addf %599, %602 : vector<4x1xf32>
    %604 = vector.broadcast %603 : vector<4x1xf32> to vector<4x256xf32>
    %605 = arith.mulf %604, %596 : vector<4x256xf32>
    %cst_82 = arith.constant 0.000000e+00 : f32
    %606 = vector.shape_cast %19 : vector<1x256xi1> to vector<1x256xi1>
    %607 = vector.broadcast %606 : vector<1x256xi1> to vector<4x256xi1>
    %608 = vector.broadcast %cst_82 : f32 to vector<4x256xf32>
    %609 = arith.select %607, %605, %608 : vector<4x256xi1>, vector<4x256xf32>
    %610 = arith.addf %585, %609 : vector<4x256xf32>
    %c2_i32_83 = arith.constant 2 : i32
    %611 = tpu.dynamic_rotate %595 by %c2_i32_83 dim 1 : vector<4x256xf32>, i32 -> vector<4x256xf32>
    %c36 = arith.constant 36 : index
    %612 = memref.load %arg2[%c36] : memref<98xf32, #tpu.memory_space<smem>>
    %613 = vector.broadcast %612 : f32 to vector<4x1xf32>
    %614 = arith.mulf %613, %8 : vector<4x1xf32>
    %c85 = arith.constant 85 : index
    %615 = memref.load %arg2[%c85] : memref<98xf32, #tpu.memory_space<smem>>
    %616 = vector.broadcast %615 : f32 to vector<4x1xf32>
    %617 = arith.mulf %616, %9 : vector<4x1xf32>
    %618 = arith.addf %614, %617 : vector<4x1xf32>
    %619 = vector.broadcast %618 : vector<4x1xf32> to vector<4x256xf32>
    %620 = arith.mulf %619, %611 : vector<4x256xf32>
    %cst_84 = arith.constant 0.000000e+00 : f32
    %621 = vector.shape_cast %24 : vector<1x256xi1> to vector<1x256xi1>
    %622 = vector.broadcast %621 : vector<1x256xi1> to vector<4x256xi1>
    %623 = vector.broadcast %cst_84 : f32 to vector<4x256xf32>
    %624 = arith.select %622, %620, %623 : vector<4x256xi1>, vector<4x256xf32>
    %625 = arith.addf %610, %624 : vector<4x256xf32>
    %c1_i32_85 = arith.constant 1 : i32
    %626 = tpu.dynamic_rotate %595 by %c1_i32_85 dim 1 : vector<4x256xf32>, i32 -> vector<4x256xf32>
    %c37 = arith.constant 37 : index
    %627 = memref.load %arg2[%c37] : memref<98xf32, #tpu.memory_space<smem>>
    %628 = vector.broadcast %627 : f32 to vector<4x1xf32>
    %629 = arith.mulf %628, %8 : vector<4x1xf32>
    %c86 = arith.constant 86 : index
    %630 = memref.load %arg2[%c86] : memref<98xf32, #tpu.memory_space<smem>>
    %631 = vector.broadcast %630 : f32 to vector<4x1xf32>
    %632 = arith.mulf %631, %9 : vector<4x1xf32>
    %633 = arith.addf %629, %632 : vector<4x1xf32>
    %634 = vector.broadcast %633 : vector<4x1xf32> to vector<4x256xf32>
    %635 = arith.mulf %634, %626 : vector<4x256xf32>
    %cst_86 = arith.constant 0.000000e+00 : f32
    %636 = vector.shape_cast %29 : vector<1x256xi1> to vector<1x256xi1>
    %637 = vector.broadcast %636 : vector<1x256xi1> to vector<4x256xi1>
    %638 = vector.broadcast %cst_86 : f32 to vector<4x256xf32>
    %639 = arith.select %637, %635, %638 : vector<4x256xi1>, vector<4x256xf32>
    %640 = arith.addf %625, %639 : vector<4x256xf32>
    %c38 = arith.constant 38 : index
    %641 = memref.load %arg2[%c38] : memref<98xf32, #tpu.memory_space<smem>>
    %642 = vector.broadcast %641 : f32 to vector<4x1xf32>
    %643 = arith.mulf %642, %8 : vector<4x1xf32>
    %c87 = arith.constant 87 : index
    %644 = memref.load %arg2[%c87] : memref<98xf32, #tpu.memory_space<smem>>
    %645 = vector.broadcast %644 : f32 to vector<4x1xf32>
    %646 = arith.mulf %645, %9 : vector<4x1xf32>
    %647 = arith.addf %643, %646 : vector<4x1xf32>
    %648 = vector.broadcast %647 : vector<4x1xf32> to vector<4x256xf32>
    %649 = arith.mulf %648, %595 : vector<4x256xf32>
    %650 = arith.addf %640, %649 : vector<4x256xf32>
    %c255_i32_87 = arith.constant 255 : i32
    %651 = tpu.dynamic_rotate %595 by %c255_i32_87 dim 1 : vector<4x256xf32>, i32 -> vector<4x256xf32>
    %c39 = arith.constant 39 : index
    %652 = memref.load %arg2[%c39] : memref<98xf32, #tpu.memory_space<smem>>
    %653 = vector.broadcast %652 : f32 to vector<4x1xf32>
    %654 = arith.mulf %653, %8 : vector<4x1xf32>
    %c88 = arith.constant 88 : index
    %655 = memref.load %arg2[%c88] : memref<98xf32, #tpu.memory_space<smem>>
    %656 = vector.broadcast %655 : f32 to vector<4x1xf32>
    %657 = arith.mulf %656, %9 : vector<4x1xf32>
    %658 = arith.addf %654, %657 : vector<4x1xf32>
    %659 = vector.broadcast %658 : vector<4x1xf32> to vector<4x256xf32>
    %660 = arith.mulf %659, %651 : vector<4x256xf32>
    %cst_88 = arith.constant 0.000000e+00 : f32
    %661 = vector.shape_cast %34 : vector<1x256xi1> to vector<1x256xi1>
    %662 = vector.broadcast %661 : vector<1x256xi1> to vector<4x256xi1>
    %663 = vector.broadcast %cst_88 : f32 to vector<4x256xf32>
    %664 = arith.select %662, %660, %663 : vector<4x256xi1>, vector<4x256xf32>
    %665 = arith.addf %650, %664 : vector<4x256xf32>
    %c254_i32_89 = arith.constant 254 : i32
    %666 = tpu.dynamic_rotate %595 by %c254_i32_89 dim 1 : vector<4x256xf32>, i32 -> vector<4x256xf32>
    %c40 = arith.constant 40 : index
    %667 = memref.load %arg2[%c40] : memref<98xf32, #tpu.memory_space<smem>>
    %668 = vector.broadcast %667 : f32 to vector<4x1xf32>
    %669 = arith.mulf %668, %8 : vector<4x1xf32>
    %c89 = arith.constant 89 : index
    %670 = memref.load %arg2[%c89] : memref<98xf32, #tpu.memory_space<smem>>
    %671 = vector.broadcast %670 : f32 to vector<4x1xf32>
    %672 = arith.mulf %671, %9 : vector<4x1xf32>
    %673 = arith.addf %669, %672 : vector<4x1xf32>
    %674 = vector.broadcast %673 : vector<4x1xf32> to vector<4x256xf32>
    %675 = arith.mulf %674, %666 : vector<4x256xf32>
    %cst_90 = arith.constant 0.000000e+00 : f32
    %676 = vector.shape_cast %39 : vector<1x256xi1> to vector<1x256xi1>
    %677 = vector.broadcast %676 : vector<1x256xi1> to vector<4x256xi1>
    %678 = vector.broadcast %cst_90 : f32 to vector<4x256xf32>
    %679 = arith.select %677, %675, %678 : vector<4x256xi1>, vector<4x256xf32>
    %680 = arith.addf %665, %679 : vector<4x256xf32>
    %c253_i32_91 = arith.constant 253 : i32
    %681 = tpu.dynamic_rotate %595 by %c253_i32_91 dim 1 : vector<4x256xf32>, i32 -> vector<4x256xf32>
    %c41 = arith.constant 41 : index
    %682 = memref.load %arg2[%c41] : memref<98xf32, #tpu.memory_space<smem>>
    %683 = vector.broadcast %682 : f32 to vector<4x1xf32>
    %684 = arith.mulf %683, %8 : vector<4x1xf32>
    %c90 = arith.constant 90 : index
    %685 = memref.load %arg2[%c90] : memref<98xf32, #tpu.memory_space<smem>>
    %686 = vector.broadcast %685 : f32 to vector<4x1xf32>
    %687 = arith.mulf %686, %9 : vector<4x1xf32>
    %688 = arith.addf %684, %687 : vector<4x1xf32>
    %689 = vector.broadcast %688 : vector<4x1xf32> to vector<4x256xf32>
    %690 = arith.mulf %689, %681 : vector<4x256xf32>
    %cst_92 = arith.constant 0.000000e+00 : f32
    %691 = vector.shape_cast %44 : vector<1x256xi1> to vector<1x256xi1>
    %692 = vector.broadcast %691 : vector<1x256xi1> to vector<4x256xi1>
    %693 = vector.broadcast %cst_92 : f32 to vector<4x256xf32>
    %694 = arith.select %692, %690, %693 : vector<4x256xi1>, vector<4x256xf32>
    %695 = arith.addf %680, %694 : vector<4x256xf32>
    %c208_i32 = arith.constant 208 : i32
    %696 = tpu.dynamic_rotate %5 by %c208_i32 dim 1 : vector<4x256xf32>, i32 -> vector<4x256xf32>
    %c-3_i32_93 = arith.constant -3 : i32
    %697 = vector.broadcast %c-3_i32_93 : i32 to vector<1x256xi32>
    %698 = arith.cmpi sge, %14, %697 : vector<1x256xi32>
    %c12_i32_94 = arith.constant 12 : i32
    %699 = vector.broadcast %c12_i32_94 : i32 to vector<1x256xi32>
    %700 = arith.cmpi sle, %14, %699 : vector<1x256xi32>
    %701 = arith.andi %698, %700 : vector<1x256xi1>
    %cst_95 = arith.constant 0.000000e+00 : f32
    %702 = vector.shape_cast %701 : vector<1x256xi1> to vector<1x256xi1>
    %703 = vector.broadcast %702 : vector<1x256xi1> to vector<4x256xi1>
    %704 = vector.broadcast %cst_95 : f32 to vector<4x256xf32>
    %705 = arith.select %703, %696, %704 : vector<4x256xi1>, vector<4x256xf32>
    %c3_i32_96 = arith.constant 3 : i32
    %706 = tpu.dynamic_rotate %705 by %c3_i32_96 dim 1 : vector<4x256xf32>, i32 -> vector<4x256xf32>
    %c42 = arith.constant 42 : index
    %707 = memref.load %arg2[%c42] : memref<98xf32, #tpu.memory_space<smem>>
    %708 = vector.broadcast %707 : f32 to vector<4x1xf32>
    %709 = arith.mulf %708, %8 : vector<4x1xf32>
    %c91 = arith.constant 91 : index
    %710 = memref.load %arg2[%c91] : memref<98xf32, #tpu.memory_space<smem>>
    %711 = vector.broadcast %710 : f32 to vector<4x1xf32>
    %712 = arith.mulf %711, %9 : vector<4x1xf32>
    %713 = arith.addf %709, %712 : vector<4x1xf32>
    %714 = vector.broadcast %713 : vector<4x1xf32> to vector<4x256xf32>
    %715 = arith.mulf %714, %706 : vector<4x256xf32>
    %cst_97 = arith.constant 0.000000e+00 : f32
    %716 = vector.shape_cast %19 : vector<1x256xi1> to vector<1x256xi1>
    %717 = vector.broadcast %716 : vector<1x256xi1> to vector<4x256xi1>
    %718 = vector.broadcast %cst_97 : f32 to vector<4x256xf32>
    %719 = arith.select %717, %715, %718 : vector<4x256xi1>, vector<4x256xf32>
    %720 = arith.addf %695, %719 : vector<4x256xf32>
    %c2_i32_98 = arith.constant 2 : i32
    %721 = tpu.dynamic_rotate %705 by %c2_i32_98 dim 1 : vector<4x256xf32>, i32 -> vector<4x256xf32>
    %c43 = arith.constant 43 : index
    %722 = memref.load %arg2[%c43] : memref<98xf32, #tpu.memory_space<smem>>
    %723 = vector.broadcast %722 : f32 to vector<4x1xf32>
    %724 = arith.mulf %723, %8 : vector<4x1xf32>
    %c92 = arith.constant 92 : index
    %725 = memref.load %arg2[%c92] : memref<98xf32, #tpu.memory_space<smem>>
    %726 = vector.broadcast %725 : f32 to vector<4x1xf32>
    %727 = arith.mulf %726, %9 : vector<4x1xf32>
    %728 = arith.addf %724, %727 : vector<4x1xf32>
    %729 = vector.broadcast %728 : vector<4x1xf32> to vector<4x256xf32>
    %730 = arith.mulf %729, %721 : vector<4x256xf32>
    %cst_99 = arith.constant 0.000000e+00 : f32
    %731 = vector.shape_cast %24 : vector<1x256xi1> to vector<1x256xi1>
    %732 = vector.broadcast %731 : vector<1x256xi1> to vector<4x256xi1>
    %733 = vector.broadcast %cst_99 : f32 to vector<4x256xf32>
    %734 = arith.select %732, %730, %733 : vector<4x256xi1>, vector<4x256xf32>
    %735 = arith.addf %720, %734 : vector<4x256xf32>
    %c1_i32_100 = arith.constant 1 : i32
    %736 = tpu.dynamic_rotate %705 by %c1_i32_100 dim 1 : vector<4x256xf32>, i32 -> vector<4x256xf32>
    %c44 = arith.constant 44 : index
    %737 = memref.load %arg2[%c44] : memref<98xf32, #tpu.memory_space<smem>>
    %738 = vector.broadcast %737 : f32 to vector<4x1xf32>
    %739 = arith.mulf %738, %8 : vector<4x1xf32>
    %c93 = arith.constant 93 : index
    %740 = memref.load %arg2[%c93] : memref<98xf32, #tpu.memory_space<smem>>
    %741 = vector.broadcast %740 : f32 to vector<4x1xf32>
    %742 = arith.mulf %741, %9 : vector<4x1xf32>
    %743 = arith.addf %739, %742 : vector<4x1xf32>
    %744 = vector.broadcast %743 : vector<4x1xf32> to vector<4x256xf32>
    %745 = arith.mulf %744, %736 : vector<4x256xf32>
    %cst_101 = arith.constant 0.000000e+00 : f32
    %746 = vector.shape_cast %29 : vector<1x256xi1> to vector<1x256xi1>
    %747 = vector.broadcast %746 : vector<1x256xi1> to vector<4x256xi1>
    %748 = vector.broadcast %cst_101 : f32 to vector<4x256xf32>
    %749 = arith.select %747, %745, %748 : vector<4x256xi1>, vector<4x256xf32>
    %750 = arith.addf %735, %749 : vector<4x256xf32>
    %c45 = arith.constant 45 : index
    %751 = memref.load %arg2[%c45] : memref<98xf32, #tpu.memory_space<smem>>
    %752 = vector.broadcast %751 : f32 to vector<4x1xf32>
    %753 = arith.mulf %752, %8 : vector<4x1xf32>
    %c94 = arith.constant 94 : index
    %754 = memref.load %arg2[%c94] : memref<98xf32, #tpu.memory_space<smem>>
    %755 = vector.broadcast %754 : f32 to vector<4x1xf32>
    %756 = arith.mulf %755, %9 : vector<4x1xf32>
    %757 = arith.addf %753, %756 : vector<4x1xf32>
    %758 = vector.broadcast %757 : vector<4x1xf32> to vector<4x256xf32>
    %759 = arith.mulf %758, %705 : vector<4x256xf32>
    %760 = arith.addf %750, %759 : vector<4x256xf32>
    %c255_i32_102 = arith.constant 255 : i32
    %761 = tpu.dynamic_rotate %705 by %c255_i32_102 dim 1 : vector<4x256xf32>, i32 -> vector<4x256xf32>
    %c46 = arith.constant 46 : index
    %762 = memref.load %arg2[%c46] : memref<98xf32, #tpu.memory_space<smem>>
    %763 = vector.broadcast %762 : f32 to vector<4x1xf32>
    %764 = arith.mulf %763, %8 : vector<4x1xf32>
    %c95 = arith.constant 95 : index
    %765 = memref.load %arg2[%c95] : memref<98xf32, #tpu.memory_space<smem>>
    %766 = vector.broadcast %765 : f32 to vector<4x1xf32>
    %767 = arith.mulf %766, %9 : vector<4x1xf32>
    %768 = arith.addf %764, %767 : vector<4x1xf32>
    %769 = vector.broadcast %768 : vector<4x1xf32> to vector<4x256xf32>
    %770 = arith.mulf %769, %761 : vector<4x256xf32>
    %cst_103 = arith.constant 0.000000e+00 : f32
    %771 = vector.shape_cast %34 : vector<1x256xi1> to vector<1x256xi1>
    %772 = vector.broadcast %771 : vector<1x256xi1> to vector<4x256xi1>
    %773 = vector.broadcast %cst_103 : f32 to vector<4x256xf32>
    %774 = arith.select %772, %770, %773 : vector<4x256xi1>, vector<4x256xf32>
    %775 = arith.addf %760, %774 : vector<4x256xf32>
    %c254_i32_104 = arith.constant 254 : i32
    %776 = tpu.dynamic_rotate %705 by %c254_i32_104 dim 1 : vector<4x256xf32>, i32 -> vector<4x256xf32>
    %c47 = arith.constant 47 : index
    %777 = memref.load %arg2[%c47] : memref<98xf32, #tpu.memory_space<smem>>
    %778 = vector.broadcast %777 : f32 to vector<4x1xf32>
    %779 = arith.mulf %778, %8 : vector<4x1xf32>
    %c96 = arith.constant 96 : index
    %780 = memref.load %arg2[%c96] : memref<98xf32, #tpu.memory_space<smem>>
    %781 = vector.broadcast %780 : f32 to vector<4x1xf32>
    %782 = arith.mulf %781, %9 : vector<4x1xf32>
    %783 = arith.addf %779, %782 : vector<4x1xf32>
    %784 = vector.broadcast %783 : vector<4x1xf32> to vector<4x256xf32>
    %785 = arith.mulf %784, %776 : vector<4x256xf32>
    %cst_105 = arith.constant 0.000000e+00 : f32
    %786 = vector.shape_cast %39 : vector<1x256xi1> to vector<1x256xi1>
    %787 = vector.broadcast %786 : vector<1x256xi1> to vector<4x256xi1>
    %788 = vector.broadcast %cst_105 : f32 to vector<4x256xf32>
    %789 = arith.select %787, %785, %788 : vector<4x256xi1>, vector<4x256xf32>
    %790 = arith.addf %775, %789 : vector<4x256xf32>
    %c253_i32_106 = arith.constant 253 : i32
    %791 = tpu.dynamic_rotate %705 by %c253_i32_106 dim 1 : vector<4x256xf32>, i32 -> vector<4x256xf32>
    %c48 = arith.constant 48 : index
    %792 = memref.load %arg2[%c48] : memref<98xf32, #tpu.memory_space<smem>>
    %793 = vector.broadcast %792 : f32 to vector<4x1xf32>
    %794 = arith.mulf %793, %8 : vector<4x1xf32>
    %c97 = arith.constant 97 : index
    %795 = memref.load %arg2[%c97] : memref<98xf32, #tpu.memory_space<smem>>
    %796 = vector.broadcast %795 : f32 to vector<4x1xf32>
    %797 = arith.mulf %796, %9 : vector<4x1xf32>
    %798 = arith.addf %794, %797 : vector<4x1xf32>
    %799 = vector.broadcast %798 : vector<4x1xf32> to vector<4x256xf32>
    %800 = arith.mulf %799, %791 : vector<4x256xf32>
    %cst_107 = arith.constant 0.000000e+00 : f32
    %801 = vector.shape_cast %44 : vector<1x256xi1> to vector<1x256xi1>
    %802 = vector.broadcast %801 : vector<1x256xi1> to vector<4x256xi1>
    %803 = vector.broadcast %cst_107 : f32 to vector<4x256xf32>
    %804 = arith.select %802, %800, %803 : vector<4x256xi1>, vector<4x256xf32>
    %805 = arith.addf %790, %804 : vector<4x256xf32>
    %806 = vector.extract_strided_slice %805 {offsets = [0, 0], sizes = [2, 256], strides = [1, 1]} : vector<4x256xf32> to vector<2x256xf32>
    %807 = vector.extract_strided_slice %805 {offsets = [2, 0], sizes = [2, 256], strides = [1, 1]} : vector<4x256xf32> to vector<2x256xf32>
    %808 = arith.addf %806, %807 : vector<2x256xf32>
    %c0_108 = arith.constant 0 : index
    %809 = memref.load %arg3[%c0_108] : memref<1xf32, #tpu.memory_space<smem>>
    %810 = vector.broadcast %809 : f32 to vector<2x256xf32>
    %811 = arith.addf %808, %810 : vector<2x256xf32>
    %cst_109 = arith.constant 0.000000e+00 : f32
    %812 = vector.broadcast %cst_109 : f32 to vector<2x256xf32>
    %813 = arith.maximumf %811, %812 : vector<2x256xf32>
    %814 = arith.negf %813 : vector<2x256xf32>
    %815 = math.exp %814 : vector<2x256xf32>
    %cst_110 = arith.constant 1.000000e+00 : f32
    %816 = vector.broadcast %cst_110 : f32 to vector<2x256xf32>
    %817 = arith.addf %816, %815 : vector<2x256xf32>
    %818 = arith.divf %816, %817 : vector<2x256xf32>
    %819 = vector.shape_cast %818 : vector<2x256xf32> to vector<2x1x256xf32>
    %820 = vector.broadcast %819 : vector<2x1x256xf32> to vector<2x4x256xf32>
    %821 = arith.mulf %0, %820 : vector<2x4x256xf32>
    %c0_111 = arith.constant 0 : index
    %c0_112 = arith.constant 0 : index
    %c0_113 = arith.constant 0 : index
    %822 = vector.load %arg4[%c0_111, %c0_112, %c0_113] : memref<2x4x256xf32, #tpu.memory_space<vmem>>, vector<2x4x256xf32>
    tpu.vector_store %arg4[%c0_111, %c0_112, %c0_113], %821 {strides = array<i32>} : memref<2x4x256xf32, #tpu.memory_space<vmem>>, vector<2x4x256xf32>,
    return
  }
  func.func @transform_0(%arg0: i32) -> (i32, i32, i32) {
    %c0_i32 = arith.constant 0 : i32
    %c0_i32_0 = arith.constant 0 : i32
    %c0_i32_1 = arith.constant 0 : i32
    return %arg0, %c0_i32, %c0_i32_0 : i32, i32, i32
  }
  func.func @transform_1(%arg0: i32) -> i32 {
    %c0_i32 = arith.constant 0 : i32
    %c0_i32_0 = arith.constant 0 : i32
    return %c0_i32 : i32
  }
  func.func @transform_2(%arg0: i32) -> i32 {
    %c0_i32 = arith.constant 0 : i32
    %c0_i32_0 = arith.constant 0 : i32
    return %c0_i32 : i32
  }
  func.func @transform_3(%arg0: i32) -> (i32, i32, i32) {
    %c0_i32 = arith.constant 0 : i32
    %c0_i32_0 = arith.constant 0 : i32
    %c0_i32_1 = arith.constant 0 : i32
    return %arg0, %c0_i32, %c0_i32_0 : i32, i32, i32
  }
}

</mosaic_0001>

<llo_original>
// kernel: tpu_custom_call.1
$region0: #{tpu_custom_call.1}
  #allocation0 [shape = 'u32[]', space=smem, size = 0x4, offset = 0x4, fixed_abs, tag = 'smem constant byte address 0x4 - core index']
  #allocation1 [shape = 'u32[144,128]{1,0:T(1,128)}', space=vmem, size = 0x12000, scoped, tag = 'internal scratch']
  #allocation2 [shape = 'f32[1]{0:T(128)S(6)}', space=smem, size = 0x200, scoped, tag = 'scoped memory for tpu_custom_call.1']
  %s0 = inlined_call_operand.hbm [shape: f32[2,4,256], index: 0, kind: input, shape index: {}]
  %s1 = inlined_call_operand.vmem [shape: f32[98], index: 1, kind: input, shape index: {}]
  %s2 = inlined_call_operand.<no memory space> [shape: f32[1], index: 2, kind: input, shape index: {}]
  %s3 = inlined_call_operand.hbm [shape: f32[2,4,256], index: 3, kind: output, shape index: {}]
  %s4 = sld [smem:[#allocation0]]
  $region30: #{tpu_custom_call.1} parent=0
    _
  %s6 = ssub.s32 1, %s4
  %s7 = scalar_select 0, %s6, %s4
  %8 = sst [smem:[#allocation2]] %s2
  $region1: #{tpu_custom_call.1} parent=0
    #allocation3 [shape = 'u8[8192]{0}', space=vmem, size = 0x2000, scoped, tag = 'input window, operand 0, single buffered']
    #allocation4 [shape = 's32[1]{0}', space=sflag, size = 0x4, scoped, tag = 'scoped memory for tpu_custom_call.1']
    #allocation5 [shape = 's32[1]{0}', space=sflag, size = 0x4, scoped, tag = 'scoped memory for tpu_custom_call.1']
    #allocation6 [shape = 's32[1]{0}', space=sflag, size = 0x4, scoped, tag = 'scoped memory for tpu_custom_call.1']
    #allocation7 [shape = 'u8[512]{0}', space=smem, size = 0x200, scoped, tag = 'input window, operand 1, single buffered']
    #allocation8 [shape = 'u8[8192]{0}', space=vmem, size = 0x2000, scoped, tag = 'output window, operand 0, single buffered']
    %9 = vsyncpa [#allocation4], 0
    %10 = vsyncpa [#allocation6], 0
    %11 = vsyncpa [#allocation5], 0
    // Predicated region
    $region2: #{tpu_custom_call.1} parent=1 // pred_check
      _
    $region3: #{tpu_custom_call.1} parent=1 // pred_check_branch
      %13 = sbr.rel (0) target = $region5
    $region4: #{tpu_custom_call.1} parent=1 // pred_region
      %s15 = ssub.s32 256, 256
      %16 = vsyncadd [#allocation4], %s15
      %s17 = sshll.u32 [#allocation3], 4
      %s18 = int_to_ptr.vmem [resolvable:$true] %s17
      %23 = dma.hbm_to_vmem [thread:$0]  %s0, 256, %s18, [#allocation4], 128, 128, 8
    $region5: #{tpu_custom_call.1} parent=1 // pred_fallthru
      _
    // Predicated region
    $region6: #{tpu_custom_call.1} parent=1 // pred_check
      _
    $region7: #{tpu_custom_call.1} parent=1 // pred_check_branch
      %25 = sbr.rel (0) target = $region9
    $region8: #{tpu_custom_call.1} parent=1 // pred_region
      %s27 = ssub.s32 16, 16
      %28 = vsyncadd [#allocation6], %s27
      %s30 = sshll.u32 %s1, 4
      %s31 = int_to_ptr.vmem [resolvable:$true] %s30
      %33 = dma.vmem_to_smem %s31, 16, [#allocation7], [#allocation6]
    $region9: #{tpu_custom_call.1} parent=1 // pred_fallthru
      _
    // Predicated region
    $region10: #{tpu_custom_call.1} parent=1 // pred_check
      _
    $region11: #{tpu_custom_call.1} parent=1 // pred_check_branch
      %35 = sbr.rel (0) target = $region13
    $region12: #{tpu_custom_call.1} parent=1 // pred_region
      _
    $region13: #{tpu_custom_call.1} parent=1 // pred_fallthru
      _
    // Predicated region
    $region14: #{tpu_custom_call.1} parent=1 // pred_check
      _
    $region15: #{tpu_custom_call.1} parent=1 // pred_check_branch
      %37 = sbr.rel (0) target = $region17
    $region16: #{tpu_custom_call.1} parent=1 // pred_region
      %38 = dma.done [#allocation4], 256
    $region17: #{tpu_custom_call.1} parent=1 // pred_fallthru
      _
    // Predicated region
    $region18: #{tpu_custom_call.1} parent=1 // pred_check
      _
    $region19: #{tpu_custom_call.1} parent=1 // pred_check_branch
      %40 = sbr.rel (0) target = $region21
    $region20: #{tpu_custom_call.1} parent=1 // pred_region
      %41 = dma.done [#allocation6], 16
    $region21: #{tpu_custom_call.1} parent=1 // pred_fallthru
      _
    %42 = sfence
    %v43 = vld [vmem:[#allocation3] sm:$0xff]
    %v44 = vld [vmem:[#allocation3 + $0x8] sm:$0xff]
    %v47 = vcombine.high %v43, %v43
    %v48 = vcombine.high %v44, %v44
    %vm51 = vcmask 1043456
    %v52 = vsel %vm51, %v43, -inf
    %v53 = vrot.slane %v52, 4
    %v54 = vmax.f32 %v52, %v53
    %v55 = vrot.slane %v54, 2
    %v56 = vmax.f32 %v54, %v55
    %v57 = vrot.slane %v56, 1
    %v58 = vmax.f32 %v56, %v57
    %v59 = vsel %vm51, %v47, -inf
    %v60 = vrot.slane %v59, 4
    %v61 = vmax.f32 %v59, %v60
    %v62 = vrot.slane %v61, 2
    %v63 = vmax.f32 %v61, %v62
    %v64 = vrot.slane %v63, 1
    %v65 = vmax.f32 %v63, %v64
    %v66 = vsel %vm51, %v44, -inf
    %v67 = vrot.slane %v66, 4
    %v68 = vmax.f32 %v66, %v67
    %v69 = vrot.slane %v68, 2
    %v70 = vmax.f32 %v68, %v69
    %v71 = vrot.slane %v70, 1
    %v72 = vmax.f32 %v70, %v71
    %v73 = vsel %vm51, %v48, -inf
    %v74 = vrot.slane %v73, 4
    %v75 = vmax.f32 %v73, %v74
    %v76 = vrot.slane %v75, 2
    %v77 = vmax.f32 %v75, %v76
    %v78 = vrot.slane %v77, 1
    %v79 = vmax.f32 %v77, %v78
    %v80 = vsel %vm51, %v43, 0.0
    %v81 = vrot.slane %v80, 4
    %v82 = vadd.f32 %v80, %v81
    %v83 = vrot.slane %v82, 2
    %v84 = vadd.f32 %v82, %v83
    %v85 = vrot.slane %v84, 1
    %v86 = vadd.f32 %v84, %v85
    %v87 = vsel %vm51, %v47, 0.0
    %v88 = vrot.slane %v87, 4
    %v89 = vadd.f32 %v87, %v88
    %v90 = vrot.slane %v89, 2
    %v91 = vadd.f32 %v89, %v90
    %v92 = vrot.slane %v91, 1
    %v93 = vadd.f32 %v91, %v92
    %v94 = vsel %vm51, %v44, 0.0
    %v95 = vrot.slane %v94, 4
    %v96 = vadd.f32 %v94, %v95
    %v97 = vrot.slane %v96, 2
    %v98 = vadd.f32 %v96, %v97
    %v99 = vrot.slane %v98, 1
    %v100 = vadd.f32 %v98, %v99
    %v101 = vsel %vm51, %v48, 0.0
    %v102 = vrot.slane %v101, 4
    %v103 = vadd.f32 %v101, %v102
    %v104 = vrot.slane %v103, 2
    %v105 = vadd.f32 %v103, %v104
    %v106 = vrot.slane %v105, 1
    %v107 = vadd.f32 %v105, %v106
    %v108 = vmul.f32 %v86, 0.25
    %v109 = vmul.f32 %v93, 0.25
    %v110 = vmul.f32 %v100, 0.25
    %v111 = vmul.f32 %v107, 0.25
    %vm116 = vcmask 1041409
    %v117 = vsel %vm116, %v72, %v58
    %v118 = vsel %vm116, %v79, %v65
    %vm125 = vcmask 1043459
    %v126 = vsel %vm125, %v110, %v108
    %v127 = vsel %vm125, %v111, %v109
    %vm130 = vcmask 1041408
    %v131 = vsel %vm130, %v117, %v126
    %v132 = vsel %vm130, %v118, %v127
    %v133 = vsel %vm130, 1.0, 0.0
    %v134 = vsel %vm130, 0.0, 1.0
    %v135 = vlaneseq
    %v136 = vand.u32 %v135, 127
    %v137 = vadd.s32 %v136, 128
    %v138 = vand.u32 %v136, 15
    %v139 = vand.u32 %v137, 15
    %v140 = vshra.s32 %v136, 4
    %v141 = vshra.s32 %v137, 4
    %vm142 = vcmp.ge.s32.totalorder %v138, 3
    %vm143 = vcmp.ge.s32.totalorder %v139, 3
    %vm144 = vcmp.le.s32.totalorder %v138, 18
    %vm145 = vcmp.le.s32.totalorder %v139, 18
    %vm146 = vmand %vm142, %vm144
    %vm147 = vmand %vm143, %vm145
    %vm148 = vcmp.ge.s32.totalorder %v138, 2
    %vm149 = vcmp.ge.s32.totalorder %v139, 2
    %vm150 = vcmp.le.s32.totalorder %v138, 17
    %vm151 = vcmp.le.s32.totalorder %v139, 17
    %vm152 = vmand %vm148, %vm150
    %vm153 = vmand %vm149, %vm151
    %vm154 = vcmp.ge.s32.totalorder %v138, 1
    %vm155 = vcmp.ge.s32.totalorder %v139, 1
    %vm156 = vcmp.le.s32.totalorder %v138, 16
    %vm157 = vcmp.le.s32.totalorder %v139, 16
    %vm158 = vmand %vm154, %vm156
    %vm159 = vmand %vm155, %vm157
    %vm160 = vcmp.ge.s32.totalorder %v138, 4294967295
    %vm161 = vcmp.ge.s32.totalorder %v139, 4294967295
    %vm162 = vcmp.le.s32.totalorder %v138, 14
    %vm163 = vcmp.le.s32.totalorder %v139, 14
    %vm164 = vmand %vm160, %vm162
    %vm165 = vmand %vm161, %vm163
    %vm166 = vcmp.ge.s32.totalorder %v138, 4294967294
    %vm167 = vcmp.ge.s32.totalorder %v139, 4294967294
    %vm168 = vcmp.le.s32.totalorder %v138, 13
    %vm169 = vcmp.le.s32.totalorder %v139, 13
    %vm170 = vmand %vm166, %vm168
    %vm171 = vmand %vm167, %vm169
    %vm172 = vcmp.ge.s32.totalorder %v138, 4294967293
    %vm173 = vcmp.ge.s32.totalorder %v139, 4294967293
    %vm174 = vcmp.le.s32.totalorder %v138, 12
    %vm175 = vcmp.le.s32.totalorder %v139, 12
    %vm176 = vmand %vm172, %vm174
    %vm177 = vmand %vm173, %vm175
    %178 = vrot.lane.b32.xlu0 %v131, 48
    %v179 = vpop.permute.xlu0 %178
    %180 = vrot.lane.b32.xlu0 %v132, 48
    %v181 = vpop.permute.xlu0 %180
    %vm182 = vcmp.lt.s32.totalorder %v136, 48
    %v183 = vsel %vm182, %v179, %v181
    %v184 = vsel %vm182, %v181, %v179
    %vm185 = vcmp.ge.s32.totalorder %v140, 3
    %vm186 = vcmp.ge.s32.totalorder %v141, 3
    %vm187 = vcmp.le.s32.totalorder %v140, 18
    %vm188 = vcmp.le.s32.totalorder %v141, 18
    %vm189 = vmand %vm185, %vm187
    %vm190 = vmand %vm186, %vm188
    %v191 = vsel %vm189, 1, 0
    %v192 = vsel %vm190, 1, 0
    %vm193 = vcmp.eq.s32.totalorder %v191, 1
    %vm194 = vcmp.eq.s32.totalorder %v192, 1
    %v195 = vsel %vm193, %v184, 0.0
    %v196 = vsel %vm194, %v183, 0.0
    %197 = vrot.lane.b32.xlu0 %v195, 3
    %v198 = vpop.permute.xlu0 %197
    %199 = vrot.lane.b32.xlu0 %v196, 3
    %v200 = vpop.permute.xlu0 %199
    %vm201 = vcmp.lt.s32.totalorder %v136, 3
    %v202 = vsel %vm201, %v198, %v200
    %v203 = vsel %vm201, %v200, %v198
    %s204 = sld [smem:[#allocation7]]
    %v205 = vstv %s204
    %v206 = vmul.f32 %v205, %v133
    %s207 = sld [smem:[#allocation7 + $0x31]]
    %v208 = vstv %s207
    %v209 = vmul.f32 %v208, %v134
    %v210 = vadd.f32 %v206, %v209
    %212 = vset.pattern.permute.xlu0 0
    %213 = vperm.xlu0 %212, %v210
    %v214 = vpop.permute.xlu0 %213
    %v216 = vmul.f32 %v214, %v203
    %v217 = vmul.f32 %v214, %v202
    %v218 = vsel %vm146, 1, 0
    %v219 = vsel %vm147, 1, 0
    %vm220 = vcmp.eq.s32.totalorder %v218, 1
    %vm221 = vcmp.eq.s32.totalorder %v219, 1
    %v222 = vsel %vm220, %v216, 0.0
    %v223 = vsel %vm221, %v217, 0.0
    %v224 = vadd.f32 %v222, 0.0
    %v225 = vadd.f32 %v223, 0.0
    %226 = vrot.lane.b32.xlu0 %v195, 2
    %v227 = vpop.permute.xlu0 %226
    %228 = vrot.lane.b32.xlu0 %v196, 2
    %v229 = vpop.permute.xlu0 %228
    %vm230 = vcmp.lt.s32.totalorder %v136, 2
    %v231 = vsel %vm230, %v227, %v229
    %v232 = vsel %vm230, %v229, %v227
    %s233 = sld [smem:[#allocation7 + $0x1]]
    %v234 = vstv %s233
    %v235 = vmul.f32 %v234, %v133
    %s236 = sld [smem:[#allocation7 + $0x32]]
    %v237 = vstv %s236
    %v238 = vmul.f32 %v237, %v134
    %v239 = vadd.f32 %v235, %v238
    %241 = vset.pattern.permute.xlu0 0
    %242 = vperm.xlu0 %241, %v239
    %v243 = vpop.permute.xlu0 %242
    %v245 = vmul.f32 %v243, %v232
    %v246 = vmul.f32 %v243, %v231
    %v247 = vsel %vm152, 1, 0
    %v248 = vsel %vm153, 1, 0
    %vm249 = vcmp.eq.s32.totalorder %v247, 1
    %vm250 = vcmp.eq.s32.totalorder %v248, 1
    %v251 = vsel %vm249, %v245, 0.0
    %v252 = vsel %vm250, %v246, 0.0
    %v253 = vadd.f32 %v224, %v251
    %v254 = vadd.f32 %v225, %v252
    %255 = vrot.lane.b32.xlu0 %v195, 1
    %v256 = vpop.permute.xlu0 %255
    %257 = vrot.lane.b32.xlu0 %v196, 1
    %v258 = vpop.permute.xlu0 %257
    %vm259 = vcmp.lt.s32.totalorder %v136, 1
    %v260 = vsel %vm259, %v256, %v258
    %v261 = vsel %vm259, %v258, %v256
    %s262 = sld [smem:[#allocation7 + $0x2]]
    %v263 = vstv %s262
    %v264 = vmul.f32 %v263, %v133
    %s265 = sld [smem:[#allocation7 + $0x33]]
    %v266 = vstv %s265
    %v267 = vmul.f32 %v266, %v134
    %v268 = vadd.f32 %v264, %v267
    %270 = vset.pattern.permute.xlu0 0
    %271 = vperm.xlu0 %270, %v268
    %v272 = vpop.permute.xlu0 %271
    %v274 = vmul.f32 %v272, %v261
    %v275 = vmul.f32 %v272, %v260
    %v276 = vsel %vm158, 1, 0
    %v277 = vsel %vm159, 1, 0
    %vm278 = vcmp.eq.s32.totalorder %v276, 1
    %vm279 = vcmp.eq.s32.totalorder %v277, 1
    %v280 = vsel %vm278, %v274, 0.0
    %v281 = vsel %vm279, %v275, 0.0
    %v282 = vadd.f32 %v253, %v280
    %v283 = vadd.f32 %v254, %v281
    %s284 = sld [smem:[#allocation7 + $0x3]]
    %v285 = vstv %s284
    %v286 = vmul.f32 %v285, %v133
    %s287 = sld [smem:[#allocation7 + $0x34]]
    %v288 = vstv %s287
    %v289 = vmul.f32 %v288, %v134
    %v290 = vadd.f32 %v286, %v289
    %292 = vset.pattern.permute.xlu0 0
    %293 = vperm.xlu0 %292, %v290
    %v294 = vpop.permute.xlu0 %293
    %v296 = vmul.f32 %v294, %v195
    %v297 = vmul.f32 %v294, %v196
    %v298 = vadd.f32 %v282, %v296
    %v299 = vadd.f32 %v283, %v297
    %300 = vrot.lane.b32.xlu0 %v195, 127
    %v301 = vpop.permute.xlu0 %300
    %302 = vrot.lane.b32.xlu0 %v196, 127
    %v303 = vpop.permute.xlu0 %302
    %vm304 = vcmp.lt.s32.totalorder %v136, 127
    %v305 = vsel %vm304, %v301, %v303
    %v306 = vsel %vm304, %v303, %v301
    %s307 = sld [smem:[#allocation7 + $0x4]]
    %v308 = vstv %s307
    %v309 = vmul.f32 %v308, %v133
    %s310 = sld [smem:[#allocation7 + $0x35]]
    %v311 = vstv %s310
    %v312 = vmul.f32 %v311, %v134
    %v313 = vadd.f32 %v309, %v312
    %315 = vset.pattern.permute.xlu0 0
    %316 = vperm.xlu0 %315, %v313
    %v317 = vpop.permute.xlu0 %316
    %v319 = vmul.f32 %v317, %v305
    %v320 = vmul.f32 %v317, %v306
    %v321 = vsel %vm164, 1, 0
    %v322 = vsel %vm165, 1, 0
    %vm323 = vcmp.eq.s32.totalorder %v321, 1
    %vm324 = vcmp.eq.s32.totalorder %v322, 1
    %v325 = vsel %vm323, %v319, 0.0
    %v326 = vsel %vm324, %v320, 0.0
    %v327 = vadd.f32 %v298, %v325
    %v328 = vadd.f32 %v299, %v326
    %329 = vrot.lane.b32.xlu0 %v195, 126
    %v330 = vpop.permute.xlu0 %329
    %331 = vrot.lane.b32.xlu0 %v196, 126
    %v332 = vpop.permute.xlu0 %331
    %vm333 = vcmp.lt.s32.totalorder %v136, 126
    %v334 = vsel %vm333, %v330, %v332
    %v335 = vsel %vm333, %v332, %v330
    %s336 = sld [smem:[#allocation7 + $0x5]]
    %v337 = vstv %s336
    %v338 = vmul.f32 %v337, %v133
    %s339 = sld [smem:[#allocation7 + $0x36]]
    %v340 = vstv %s339
    %v341 = vmul.f32 %v340, %v134
    %v342 = vadd.f32 %v338, %v341
    %344 = vset.pattern.permute.xlu0 0
    %345 = vperm.xlu0 %344, %v342
    %v346 = vpop.permute.xlu0 %345
    %v348 = vmul.f32 %v346, %v334
    %v349 = vmul.f32 %v346, %v335
    %v350 = vsel %vm170, 1, 0
    %v351 = vsel %vm171, 1, 0
    %vm352 = vcmp.eq.s32.totalorder %v350, 1
    %vm353 = vcmp.eq.s32.totalorder %v351, 1
    %v354 = vsel %vm352, %v348, 0.0
    %v355 = vsel %vm353, %v349, 0.0
    %v356 = vadd.f32 %v327, %v354
    %v357 = vadd.f32 %v328, %v355
    %358 = vrot.lane.b32.xlu0 %v195, 125
    %v359 = vpop.permute.xlu0 %358
    %360 = vrot.lane.b32.xlu0 %v196, 125
    %v361 = vpop.permute.xlu0 %360
    %vm362 = vcmp.lt.s32.totalorder %v136, 125
    %v363 = vsel %vm362, %v359, %v361
    %v364 = vsel %vm362, %v361, %v359
    %s365 = sld [smem:[#allocation7 + $0x6]]
    %v366 = vstv %s365
    %v367 = vmul.f32 %v366, %v133
    %s368 = sld [smem:[#allocation7 + $0x37]]
    %v369 = vstv %s368
    %v370 = vmul.f32 %v369, %v134
    %v371 = vadd.f32 %v367, %v370
    %373 = vset.pattern.permute.xlu0 0
    %374 = vperm.xlu0 %373, %v371
    %v375 = vpop.permute.xlu0 %374
    %v377 = vmul.f32 %v375, %v363
    %v378 = vmul.f32 %v375, %v364
    %v379 = vsel %vm176, 1, 0
    %v380 = vsel %vm177, 1, 0
    %vm381 = vcmp.eq.s32.totalorder %v379, 1
    %vm382 = vcmp.eq.s32.totalorder %v380, 1
    %v383 = vsel %vm381, %v377, 0.0
    %v384 = vsel %vm382, %v378, 0.0
    %v385 = vadd.f32 %v356, %v383
    %v386 = vadd.f32 %v357, %v384
    %387 = vrot.lane.b32.xlu0 %v131, 32
    %v388 = vpop.permute.xlu0 %387
    %389 = vrot.lane.b32.xlu0 %v132, 32
    %v390 = vpop.permute.xlu0 %389
    %vm391 = vcmp.lt.s32.totalorder %v136, 32
    %v392 = vsel %vm391, %v388, %v390
    %v393 = vsel %vm391, %v390, %v388
    %vm394 = vcmp.ge.s32.totalorder %v140, 2
    %vm395 = vcmp.ge.s32.totalorder %v141, 2
    %vm396 = vcmp.le.s32.totalorder %v140, 17
    %vm397 = vcmp.le.s32.totalorder %v141, 17
    %vm398 = vmand %vm394, %vm396
    %vm399 = vmand %vm395, %vm397
    %v400 = vsel %vm398, 1, 0
    %v401 = vsel %vm399, 1, 0
    %vm402 = vcmp.eq.s32.totalorder %v400, 1
    %vm403 = vcmp.eq.s32.totalorder %v401, 1
    %v404 = vsel %vm402, %v393, 0.0
    %v405 = vsel %vm403, %v392, 0.0
    %406 = vrot.lane.b32.xlu0 %v404, 3
    %v407 = vpop.permute.xlu0 %406
    %408 = vrot.lane.b32.xlu0 %v405, 3
    %v409 = vpop.permute.xlu0 %408
    %v410 = vsel %vm201, %v407, %v409
    %v411 = vsel %vm201, %v409, %v407
    %s412 = sld [smem:[#allocation7 + $0x7]]
    %v413 = vstv %s412
    %v414 = vmul.f32 %v413, %v133
    %s415 = sld [smem:[#allocation7 + $0x38]]
    %v416 = vstv %s415
    %v417 = vmul.f32 %v416, %v134
    %v418 = vadd.f32 %v414, %v417
    %420 = vset.pattern.permute.xlu0 0
    %421 = vperm.xlu0 %420, %v418
    %v422 = vpop.permute.xlu0 %421
    %v424 = vmul.f32 %v422, %v411
    %v425 = vmul.f32 %v422, %v410
    %v426 = vsel %vm220, %v424, 0.0
    %v427 = vsel %vm221, %v425, 0.0
    %v428 = vadd.f32 %v385, %v426
    %v429 = vadd.f32 %v386, %v427
    %430 = vrot.lane.b32.xlu0 %v404, 2
    %v431 = vpop.permute.xlu0 %430
    %432 = vrot.lane.b32.xlu0 %v405, 2
    %v433 = vpop.permute.xlu0 %432
    %v434 = vsel %vm230, %v431, %v433
    %v435 = vsel %vm230, %v433, %v431
    %s436 = sld [smem:[#allocation7 + $0x8]]
    %v437 = vstv %s436
    %v438 = vmul.f32 %v437, %v133
    %s439 = sld [smem:[#allocation7 + $0x39]]
    %v440 = vstv %s439
    %v441 = vmul.f32 %v440, %v134
    %v442 = vadd.f32 %v438, %v441
    %444 = vset.pattern.permute.xlu0 0
    %445 = vperm.xlu0 %444, %v442
    %v446 = vpop.permute.xlu0 %445
    %v448 = vmul.f32 %v446, %v435
    %v449 = vmul.f32 %v446, %v434
    %v450 = vsel %vm249, %v448, 0.0
    %v451 = vsel %vm250, %v449, 0.0
    %v452 = vadd.f32 %v428, %v450
    %v453 = vadd.f32 %v429, %v451
    %454 = vrot.lane.b32.xlu0 %v404, 1
    %v455 = vpop.permute.xlu0 %454
    %456 = vrot.lane.b32.xlu0 %v405, 1
    %v457 = vpop.permute.xlu0 %456
    %v458 = vsel %vm259, %v455, %v457
    %v459 = vsel %vm259, %v457, %v455
    %s460 = sld [smem:[#allocation7 + $0x9]]
    %v461 = vstv %s460
    %v462 = vmul.f32 %v461, %v133
    %s463 = sld [smem:[#allocation7 + $0x3a]]
    %v464 = vstv %s463
    %v465 = vmul.f32 %v464, %v134
    %v466 = vadd.f32 %v462, %v465
    %468 = vset.pattern.permute.xlu0 0
    %469 = vperm.xlu0 %468, %v466
    %v470 = vpop.permute.xlu0 %469
    %v472 = vmul.f32 %v470, %v459
    %v473 = vmul.f32 %v470, %v458
    %v474 = vsel %vm278, %v472, 0.0
    %v475 = vsel %vm279, %v473, 0.0
    %v476 = vadd.f32 %v452, %v474
    %v477 = vadd.f32 %v453, %v475
    %s478 = sld [smem:[#allocation7 + $0xa]]
    %v479 = vstv %s478
    %v480 = vmul.f32 %v479, %v133
    %s481 = sld [smem:[#allocation7 + $0x3b]]
    %v482 = vstv %s481
    %v483 = vmul.f32 %v482, %v134
    %v484 = vadd.f32 %v480, %v483
    %486 = vset.pattern.permute.xlu0 0
    %487 = vperm.xlu0 %486, %v484
    %v488 = vpop.permute.xlu0 %487
    %v490 = vmul.f32 %v488, %v404
    %v491 = vmul.f32 %v488, %v405
    %v492 = vadd.f32 %v476, %v490
    %v493 = vadd.f32 %v477, %v491
    %494 = vrot.lane.b32.xlu0 %v404, 127
    %v495 = vpop.permute.xlu0 %494
    %496 = vrot.lane.b32.xlu0 %v405, 127
    %v497 = vpop.permute.xlu0 %496
    %v498 = vsel %vm304, %v495, %v497
    %v499 = vsel %vm304, %v497, %v495
    %s500 = sld [smem:[#allocation7 + $0xb]]
    %v501 = vstv %s500
    %v502 = vmul.f32 %v501, %v133
    %s503 = sld [smem:[#allocation7 + $0x3c]]
    %v504 = vstv %s503
    %v505 = vmul.f32 %v504, %v134
    %v506 = vadd.f32 %v502, %v505
    %508 = vset.pattern.permute.xlu0 0
    %509 = vperm.xlu0 %508, %v506
    %v510 = vpop.permute.xlu0 %509
    %v512 = vmul.f32 %v510, %v498
    %v513 = vmul.f32 %v510, %v499
    %v514 = vsel %vm323, %v512, 0.0
    %v515 = vsel %vm324, %v513, 0.0
    %v516 = vadd.f32 %v492, %v514
    %v517 = vadd.f32 %v493, %v515
    %518 = vrot.lane.b32.xlu0 %v404, 126
    %v519 = vpop.permute.xlu0 %518
    %520 = vrot.lane.b32.xlu0 %v405, 126
    %v521 = vpop.permute.xlu0 %520
    %v522 = vsel %vm333, %v519, %v521
    %v523 = vsel %vm333, %v521, %v519
    %s524 = sld [smem:[#allocation7 + $0xc]]
    %v525 = vstv %s524
    %v526 = vmul.f32 %v525, %v133
    %s527 = sld [smem:[#allocation7 + $0x3d]]
    %v528 = vstv %s527
    %v529 = vmul.f32 %v528, %v134
    %v530 = vadd.f32 %v526, %v529
    %532 = vset.pattern.permute.xlu0 0
    %533 = vperm.xlu0 %532, %v530
    %v534 = vpop.permute.xlu0 %533
    %v536 = vmul.f32 %v534, %v522
    %v537 = vmul.f32 %v534, %v523
    %v538 = vsel %vm352, %v536, 0.0
    %v539 = vsel %vm353, %v537, 0.0
    %v540 = vadd.f32 %v516, %v538
    %v541 = vadd.f32 %v517, %v539
    %542 = vrot.lane.b32.xlu0 %v404, 125
    %v543 = vpop.permute.xlu0 %542
    %544 = vrot.lane.b32.xlu0 %v405, 125
    %v545 = vpop.permute.xlu0 %544
    %v546 = vsel %vm362, %v543, %v545
    %v547 = vsel %vm362, %v545, %v543
    %s548 = sld [smem:[#allocation7 + $0xd]]
    %v549 = vstv %s548
    %v550 = vmul.f32 %v549, %v133
    %s551 = sld [smem:[#allocation7 + $0x3e]]
    %v552 = vstv %s551
    %v553 = vmul.f32 %v552, %v134
    %v554 = vadd.f32 %v550, %v553
    %556 = vset.pattern.permute.xlu0 0
    %557 = vperm.xlu0 %556, %v554
    %v558 = vpop.permute.xlu0 %557
    %v560 = vmul.f32 %v558, %v546
    %v561 = vmul.f32 %v558, %v547
    %v562 = vsel %vm381, %v560, 0.0
    %v563 = vsel %vm382, %v561, 0.0
    %v564 = vadd.f32 %v540, %v562
    %v565 = vadd.f32 %v541, %v563
    %566 = vrot.lane.b32.xlu0 %v131, 16
    %v567 = vpop.permute.xlu0 %566
    %568 = vrot.lane.b32.xlu0 %v132, 16
    %v569 = vpop.permute.xlu0 %568
    %vm570 = vcmp.lt.s32.totalorder %v136, 16
    %v571 = vsel %vm570, %v567, %v569
    %v572 = vsel %vm570, %v569, %v567
    %vm573 = vcmp.ge.s32.totalorder %v140, 1
    %vm574 = vcmp.ge.s32.totalorder %v141, 1
    %vm575 = vcmp.le.s32.totalorder %v140, 16
    %vm576 = vcmp.le.s32.totalorder %v141, 16
    %vm577 = vmand %vm573, %vm575
    %vm578 = vmand %vm574, %vm576
    %v579 = vsel %vm577, 1, 0
    %v580 = vsel %vm578, 1, 0
    %vm581 = vcmp.eq.s32.totalorder %v579, 1
    %vm582 = vcmp.eq.s32.totalorder %v580, 1
    %v583 = vsel %vm581, %v572, 0.0
    %v584 = vsel %vm582, %v571, 0.0
    %585 = vrot.lane.b32.xlu0 %v583, 3
    %v586 = vpop.permute.xlu0 %585
    %587 = vrot.lane.b32.xlu0 %v584, 3
    %v588 = vpop.permute.xlu0 %587
    %v589 = vsel %vm201, %v586, %v588
    %v590 = vsel %vm201, %v588, %v586
    %s591 = sld [smem:[#allocation7 + $0xe]]
    %v592 = vstv %s591
    %v593 = vmul.f32 %v592, %v133
    %s594 = sld [smem:[#allocation7 + $0x3f]]
    %v595 = vstv %s594
    %v596 = vmul.f32 %v595, %v134
    %v597 = vadd.f32 %v593, %v596
    %599 = vset.pattern.permute.xlu0 0
    %600 = vperm.xlu0 %599, %v597
    %v601 = vpop.permute.xlu0 %600
    %v603 = vmul.f32 %v601, %v590
    %v604 = vmul.f32 %v601, %v589
    %v605 = vsel %vm220, %v603, 0.0
    %v606 = vsel %vm221, %v604, 0.0
    %v607 = vadd.f32 %v564, %v605
    %v608 = vadd.f32 %v565, %v606
    %609 = vrot.lane.b32.xlu0 %v583, 2
    %v610 = vpop.permute.xlu0 %609
    %611 = vrot.lane.b32.xlu0 %v584, 2
    %v612 = vpop.permute.xlu0 %611
    %v613 = vsel %vm230, %v610, %v612
    %v614 = vsel %vm230, %v612, %v610
    %s615 = sld [smem:[#allocation7 + $0xf]]
    %v616 = vstv %s615
    %v617 = vmul.f32 %v616, %v133
    %s618 = sld [smem:[#allocation7 + $0x40]]
    %v619 = vstv %s618
    %v620 = vmul.f32 %v619, %v134
    %v621 = vadd.f32 %v617, %v620
    %623 = vset.pattern.permute.xlu0 0
    %624 = vperm.xlu0 %623, %v621
    %v625 = vpop.permute.xlu0 %624
    %v627 = vmul.f32 %v625, %v614
    %v628 = vmul.f32 %v625, %v613
    %v629 = vsel %vm249, %v627, 0.0
    %v630 = vsel %vm250, %v628, 0.0
    %v631 = vadd.f32 %v607, %v629
    %v632 = vadd.f32 %v608, %v630
    %633 = vrot.lane.b32.xlu0 %v583, 1
    %v634 = vpop.permute.xlu0 %633
    %635 = vrot.lane.b32.xlu0 %v584, 1
    %v636 = vpop.permute.xlu0 %635
    %v637 = vsel %vm259, %v634, %v636
    %v638 = vsel %vm259, %v636, %v634
    %s639 = sld [smem:[#allocation7 + $0x10]]
    %v640 = vstv %s639
    %v641 = vmul.f32 %v640, %v133
    %s642 = sld [smem:[#allocation7 + $0x41]]
    %v643 = vstv %s642
    %v644 = vmul.f32 %v643, %v134
    %v645 = vadd.f32 %v641, %v644
    %647 = vset.pattern.permute.xlu0 0
    %648 = vperm.xlu0 %647, %v645
    %v649 = vpop.permute.xlu0 %648
    %v651 = vmul.f32 %v649, %v638
    %v652 = vmul.f32 %v649, %v637
    %v653 = vsel %vm278, %v651, 0.0
    %v654 = vsel %vm279, %v652, 0.0
    %v655 = vadd.f32 %v631, %v653
    %v656 = vadd.f32 %v632, %v654
    %s657 = sld [smem:[#allocation7 + $0x11]]
    %v658 = vstv %s657
    %v659 = vmul.f32 %v658, %v133
    %s660 = sld [smem:[#allocation7 + $0x42]]
    %v661 = vstv %s660
    %v662 = vmul.f32 %v661, %v134
    %v663 = vadd.f32 %v659, %v662
    %665 = vset.pattern.permute.xlu0 0
    %666 = vperm.xlu0 %665, %v663
    %v667 = vpop.permute.xlu0 %666
    %v669 = vmul.f32 %v667, %v583
    %v670 = vmul.f32 %v667, %v584
    %v671 = vadd.f32 %v655, %v669
    %v672 = vadd.f32 %v656, %v670
    %673 = vrot.lane.b32.xlu0 %v583, 127
    %v674 = vpop.permute.xlu0 %673
    %675 = vrot.lane.b32.xlu0 %v584, 127
    %v676 = vpop.permute.xlu0 %675
    %v677 = vsel %vm304, %v674, %v676
    %v678 = vsel %vm304, %v676, %v674
    %s679 = sld [smem:[#allocation7 + $0x12]]
    %v680 = vstv %s679
    %v681 = vmul.f32 %v680, %v133
    %s682 = sld [smem:[#allocation7 + $0x43]]
    %v683 = vstv %s682
    %v684 = vmul.f32 %v683, %v134
    %v685 = vadd.f32 %v681, %v684
    %687 = vset.pattern.permute.xlu0 0
    %688 = vperm.xlu0 %687, %v685
    %v689 = vpop.permute.xlu0 %688
    %v691 = vmul.f32 %v689, %v677
    %v692 = vmul.f32 %v689, %v678
    %v693 = vsel %vm323, %v691, 0.0
    %v694 = vsel %vm324, %v692, 0.0
    %v695 = vadd.f32 %v671, %v693
    %v696 = vadd.f32 %v672, %v694
    %697 = vrot.lane.b32.xlu0 %v583, 126
    %v698 = vpop.permute.xlu0 %697
    %699 = vrot.lane.b32.xlu0 %v584, 126
    %v700 = vpop.permute.xlu0 %699
    %v701 = vsel %vm333, %v698, %v700
    %v702 = vsel %vm333, %v700, %v698
    %s703 = sld [smem:[#allocation7 + $0x13]]
    %v704 = vstv %s703
    %v705 = vmul.f32 %v704, %v133
    %s706 = sld [smem:[#allocation7 + $0x44]]
    %v707 = vstv %s706
    %v708 = vmul.f32 %v707, %v134
    %v709 = vadd.f32 %v705, %v708
    %711 = vset.pattern.permute.xlu0 0
    %712 = vperm.xlu0 %711, %v709
    %v713 = vpop.permute.xlu0 %712
    %v715 = vmul.f32 %v713, %v701
    %v716 = vmul.f32 %v713, %v702
    %v717 = vsel %vm352, %v715, 0.0
    %v718 = vsel %vm353, %v716, 0.0
    %v719 = vadd.f32 %v695, %v717
    %v720 = vadd.f32 %v696, %v718
    %721 = vrot.lane.b32.xlu0 %v583, 125
    %v722 = vpop.permute.xlu0 %721
    %723 = vrot.lane.b32.xlu0 %v584, 125
    %v724 = vpop.permute.xlu0 %723
    %v725 = vsel %vm362, %v722, %v724
    %v726 = vsel %vm362, %v724, %v722
    %s727 = sld [smem:[#allocation7 + $0x14]]
    %v728 = vstv %s727
    %v729 = vmul.f32 %v728, %v133
    %s730 = sld [smem:[#allocation7 + $0x45]]
    %v731 = vstv %s730
    %v732 = vmul.f32 %v731, %v134
    %v733 = vadd.f32 %v729, %v732
    %735 = vset.pattern.permute.xlu0 0
    %736 = vperm.xlu0 %735, %v733
    %v737 = vpop.permute.xlu0 %736
    %v739 = vmul.f32 %v737, %v725
    %v740 = vmul.f32 %v737, %v726
    %v741 = vsel %vm381, %v739, 0.0
    %v742 = vsel %vm382, %v740, 0.0
    %v743 = vadd.f32 %v719, %v741
    %v744 = vadd.f32 %v720, %v742
    %745 = vrot.lane.b32.xlu0 %v131, 3
    %v746 = vpop.permute.xlu0 %745
    %747 = vrot.lane.b32.xlu0 %v132, 3
    %v748 = vpop.permute.xlu0 %747
    %v749 = vsel %vm201, %v746, %v748
    %v750 = vsel %vm201, %v748, %v746
    %s751 = sld [smem:[#allocation7 + $0x15]]
    %v752 = vstv %s751
    %v753 = vmul.f32 %v752, %v133
    %s754 = sld [smem:[#allocation7 + $0x46]]
    %v755 = vstv %s754
    %v756 = vmul.f32 %v755, %v134
    %v757 = vadd.f32 %v753, %v756
    %759 = vset.pattern.permute.xlu0 0
    %760 = vperm.xlu0 %759, %v757
    %v761 = vpop.permute.xlu0 %760
    %v763 = vmul.f32 %v761, %v750
    %v764 = vmul.f32 %v761, %v749
    %v765 = vsel %vm220, %v763, 0.0
    %v766 = vsel %vm221, %v764, 0.0
    %v767 = vadd.f32 %v743, %v765
    %v768 = vadd.f32 %v744, %v766
    %769 = vrot.lane.b32.xlu0 %v131, 2
    %v770 = vpop.permute.xlu0 %769
    %771 = vrot.lane.b32.xlu0 %v132, 2
    %v772 = vpop.permute.xlu0 %771
    %v773 = vsel %vm230, %v770, %v772
    %v774 = vsel %vm230, %v772, %v770
    %s775 = sld [smem:[#allocation7 + $0x16]]
    %v776 = vstv %s775
    %v777 = vmul.f32 %v776, %v133
    %s778 = sld [smem:[#allocation7 + $0x47]]
    %v779 = vstv %s778
    %v780 = vmul.f32 %v779, %v134
    %v781 = vadd.f32 %v777, %v780
    %783 = vset.pattern.permute.xlu0 0
    %784 = vperm.xlu0 %783, %v781
    %v785 = vpop.permute.xlu0 %784
    %v787 = vmul.f32 %v785, %v774
    %v788 = vmul.f32 %v785, %v773
    %v789 = vsel %vm249, %v787, 0.0
    %v790 = vsel %vm250, %v788, 0.0
    %v791 = vadd.f32 %v767, %v789
    %v792 = vadd.f32 %v768, %v790
    %793 = vrot.lane.b32.xlu0 %v131, 1
    %v794 = vpop.permute.xlu0 %793
    %795 = vrot.lane.b32.xlu0 %v132, 1
    %v796 = vpop.permute.xlu0 %795
    %v797 = vsel %vm259, %v794, %v796
    %v798 = vsel %vm259, %v796, %v794
    %s799 = sld [smem:[#allocation7 + $0x17]]
    %v800 = vstv %s799
    %v801 = vmul.f32 %v800, %v133
    %s802 = sld [smem:[#allocation7 + $0x48]]
    %v803 = vstv %s802
    %v804 = vmul.f32 %v803, %v134
    %v805 = vadd.f32 %v801, %v804
    %807 = vset.pattern.permute.xlu0 0
    %808 = vperm.xlu0 %807, %v805
    %v809 = vpop.permute.xlu0 %808
    %v811 = vmul.f32 %v809, %v798
    %v812 = vmul.f32 %v809, %v797
    %v813 = vsel %vm278, %v811, 0.0
    %v814 = vsel %vm279, %v812, 0.0
    %v815 = vadd.f32 %v791, %v813
    %v816 = vadd.f32 %v792, %v814
    %s817 = sld [smem:[#allocation7 + $0x18]]
    %v818 = vstv %s817
    %v819 = vmul.f32 %v818, %v133
    %s820 = sld [smem:[#allocation7 + $0x49]]
    %v821 = vstv %s820
    %v822 = vmul.f32 %v821, %v134
    %v823 = vadd.f32 %v819, %v822
    %825 = vset.pattern.permute.xlu0 0
    %826 = vperm.xlu0 %825, %v823
    %v827 = vpop.permute.xlu0 %826
    %v829 = vmul.f32 %v827, %v131
    %v830 = vmul.f32 %v827, %v132
    %v831 = vadd.f32 %v815, %v829
    %v832 = vadd.f32 %v816, %v830
    %833 = vrot.lane.b32.xlu0 %v131, 127
    %v834 = vpop.permute.xlu0 %833
    %835 = vrot.lane.b32.xlu0 %v132, 127
    %v836 = vpop.permute.xlu0 %835
    %v837 = vsel %vm304, %v834, %v836
    %v838 = vsel %vm304, %v836, %v834
    %s839 = sld [smem:[#allocation7 + $0x19]]
    %v840 = vstv %s839
    %v841 = vmul.f32 %v840, %v133
    %s842 = sld [smem:[#allocation7 + $0x4a]]
    %v843 = vstv %s842
    %v844 = vmul.f32 %v843, %v134
    %v845 = vadd.f32 %v841, %v844
    %847 = vset.pattern.permute.xlu0 0
    %848 = vperm.xlu0 %847, %v845
    %v849 = vpop.permute.xlu0 %848
    %v851 = vmul.f32 %v849, %v837
    %v852 = vmul.f32 %v849, %v838
    %v853 = vsel %vm323, %v851, 0.0
    %v854 = vsel %vm324, %v852, 0.0
    %v855 = vadd.f32 %v831, %v853
    %v856 = vadd.f32 %v832, %v854
    %857 = vrot.lane.b32.xlu0 %v131, 126
    %v858 = vpop.permute.xlu0 %857
    %859 = vrot.lane.b32.xlu0 %v132, 126
    %v860 = vpop.permute.xlu0 %859
    %v861 = vsel %vm333, %v858, %v860
    %v862 = vsel %vm333, %v860, %v858
    %s863 = sld [smem:[#allocation7 + $0x1a]]
    %v864 = vstv %s863
    %v865 = vmul.f32 %v864, %v133
    %s866 = sld [smem:[#allocation7 + $0x4b]]
    %v867 = vstv %s866
    %v868 = vmul.f32 %v867, %v134
    %v869 = vadd.f32 %v865, %v868
    %871 = vset.pattern.permute.xlu0 0
    %872 = vperm.xlu0 %871, %v869
    %v873 = vpop.permute.xlu0 %872
    %v875 = vmul.f32 %v873, %v861
    %v876 = vmul.f32 %v873, %v862
    %v877 = vsel %vm352, %v875, 0.0
    %v878 = vsel %vm353, %v876, 0.0
    %v879 = vadd.f32 %v855, %v877
    %v880 = vadd.f32 %v856, %v878
    %881 = vrot.lane.b32.xlu0 %v131, 125
    %v882 = vpop.permute.xlu0 %881
    %883 = vrot.lane.b32.xlu0 %v132, 125
    %v884 = vpop.permute.xlu0 %883
    %v885 = vsel %vm362, %v882, %v884
    %v886 = vsel %vm362, %v884, %v882
    %s887 = sld [smem:[#allocation7 + $0x1b]]
    %v888 = vstv %s887
    %v889 = vmul.f32 %v888, %v133
    %s890 = sld [smem:[#allocation7 + $0x4c]]
    %v891 = vstv %s890
    %v892 = vmul.f32 %v891, %v134
    %v893 = vadd.f32 %v889, %v892
    %895 = vset.pattern.permute.xlu0 0
    %896 = vperm.xlu0 %895, %v893
    %v897 = vpop.permute.xlu0 %896
    %v899 = vmul.f32 %v897, %v885
    %v900 = vmul.f32 %v897, %v886
    %v901 = vsel %vm381, %v899, 0.0
    %v902 = vsel %vm382, %v900, 0.0
    %v903 = vadd.f32 %v879, %v901
    %v904 = vadd.f32 %v880, %v902
    %905 = vrot.lane.b32.xlu0 %v131, 112
    %v906 = vpop.permute.xlu0 %905
    %907 = vrot.lane.b32.xlu0 %v132, 112
    %v908 = vpop.permute.xlu0 %907
    %vm909 = vcmp.lt.s32.totalorder %v136, 112
    %v910 = vsel %vm909, %v906, %v908
    %v911 = vsel %vm909, %v908, %v906
    %vm912 = vcmp.ge.s32.totalorder %v140, 4294967295
    %vm913 = vcmp.ge.s32.totalorder %v141, 4294967295
    %vm914 = vcmp.le.s32.totalorder %v140, 14
    %vm915 = vcmp.le.s32.totalorder %v141, 14
    %vm916 = vmand %vm912, %vm914
    %vm917 = vmand %vm913, %vm915
    %v918 = vsel %vm916, 1, 0
    %v919 = vsel %vm917, 1, 0
    %vm920 = vcmp.eq.s32.totalorder %v918, 1
    %vm921 = vcmp.eq.s32.totalorder %v919, 1
    %v922 = vsel %vm920, %v910, 0.0
    %v923 = vsel %vm921, %v911, 0.0
    %924 = vrot.lane.b32.xlu0 %v922, 3
    %v925 = vpop.permute.xlu0 %924
    %926 = vrot.lane.b32.xlu0 %v923, 3
    %v927 = vpop.permute.xlu0 %926
    %v928 = vsel %vm201, %v925, %v927
    %v929 = vsel %vm201, %v927, %v925
    %s930 = sld [smem:[#allocation7 + $0x1c]]
    %v931 = vstv %s930
    %v932 = vmul.f32 %v931, %v133
    %s933 = sld [smem:[#allocation7 + $0x4d]]
    %v934 = vstv %s933
    %v935 = vmul.f32 %v934, %v134
    %v936 = vadd.f32 %v932, %v935
    %938 = vset.pattern.permute.xlu0 0
    %939 = vperm.xlu0 %938, %v936
    %v940 = vpop.permute.xlu0 %939
    %v942 = vmul.f32 %v940, %v929
    %v943 = vmul.f32 %v940, %v928
    %v944 = vsel %vm220, %v942, 0.0
    %v945 = vsel %vm221, %v943, 0.0
    %v946 = vadd.f32 %v903, %v944
    %v947 = vadd.f32 %v904, %v945
    %948 = vrot.lane.b32.xlu0 %v922, 2
    %v949 = vpop.permute.xlu0 %948
    %950 = vrot.lane.b32.xlu0 %v923, 2
    %v951 = vpop.permute.xlu0 %950
    %v952 = vsel %vm230, %v949, %v951
    %v953 = vsel %vm230, %v951, %v949
    %s954 = sld [smem:[#allocation7 + $0x1d]]
    %v955 = vstv %s954
    %v956 = vmul.f32 %v955, %v133
    %s957 = sld [smem:[#allocation7 + $0x4e]]
    %v958 = vstv %s957
    %v959 = vmul.f32 %v958, %v134
    %v960 = vadd.f32 %v956, %v959
    %962 = vset.pattern.permute.xlu0 0
    %963 = vperm.xlu0 %962, %v960
    %v964 = vpop.permute.xlu0 %963
    %v966 = vmul.f32 %v964, %v953
    %v967 = vmul.f32 %v964, %v952
    %v968 = vsel %vm249, %v966, 0.0
    %v969 = vsel %vm250, %v967, 0.0
    %v970 = vadd.f32 %v946, %v968
    %v971 = vadd.f32 %v947, %v969
    %972 = vrot.lane.b32.xlu0 %v922, 1
    %v973 = vpop.permute.xlu0 %972
    %974 = vrot.lane.b32.xlu0 %v923, 1
    %v975 = vpop.permute.xlu0 %974
    %v976 = vsel %vm259, %v973, %v975
    %v977 = vsel %vm259, %v975, %v973
    %s978 = sld [smem:[#allocation7 + $0x1e]]
    %v979 = vstv %s978
    %v980 = vmul.f32 %v979, %v133
    %s981 = sld [smem:[#allocation7 + $0x4f]]
    %v982 = vstv %s981
    %v983 = vmul.f32 %v982, %v134
    %v984 = vadd.f32 %v980, %v983
    %986 = vset.pattern.permute.xlu0 0
    %987 = vperm.xlu0 %986, %v984
    %v988 = vpop.permute.xlu0 %987
    %v990 = vmul.f32 %v988, %v977
    %v991 = vmul.f32 %v988, %v976
    %v992 = vsel %vm278, %v990, 0.0
    %v993 = vsel %vm279, %v991, 0.0
    %v994 = vadd.f32 %v970, %v992
    %v995 = vadd.f32 %v971, %v993
    %s996 = sld [smem:[#allocation7 + $0x1f]]
    %v997 = vstv %s996
    %v998 = vmul.f32 %v997, %v133
    %s999 = sld [smem:[#allocation7 + $0x50]]
    %v1000 = vstv %s999
    %v1001 = vmul.f32 %v1000, %v134
    %v1002 = vadd.f32 %v998, %v1001
    %1004 = vset.pattern.permute.xlu0 0
    %1005 = vperm.xlu0 %1004, %v1002
    %v1006 = vpop.permute.xlu0 %1005
    %v1008 = vmul.f32 %v1006, %v922
    %v1009 = vmul.f32 %v1006, %v923
    %v1010 = vadd.f32 %v994, %v1008
    %v1011 = vadd.f32 %v995, %v1009
    %1012 = vrot.lane.b32.xlu0 %v922, 127
    %v1013 = vpop.permute.xlu0 %1012
    %1014 = vrot.lane.b32.xlu0 %v923, 127
    %v1015 = vpop.permute.xlu0 %1014
    %v1016 = vsel %vm304, %v1013, %v1015
    %v1017 = vsel %vm304, %v1015, %v1013
    %s1018 = sld [smem:[#allocation7 + $0x20]]
    %v1019 = vstv %s1018
    %v1020 = vmul.f32 %v1019, %v133
    %s1021 = sld [smem:[#allocation7 + $0x51]]
    %v1022 = vstv %s1021
    %v1023 = vmul.f32 %v1022, %v134
    %v1024 = vadd.f32 %v1020, %v1023
    %1026 = vset.pattern.permute.xlu0 0
    %1027 = vperm.xlu0 %1026, %v1024
    %v1028 = vpop.permute.xlu0 %1027
    %v1030 = vmul.f32 %v1028, %v1016
    %v1031 = vmul.f32 %v1028, %v1017
    %v1032 = vsel %vm323, %v1030, 0.0
    %v1033 = vsel %vm324, %v1031, 0.0
    %v1034 = vadd.f32 %v1010, %v1032
    %v1035 = vadd.f32 %v1011, %v1033
    %1036 = vrot.lane.b32.xlu0 %v922, 126
    %v1037 = vpop.permute.xlu0 %1036
    %1038 = vrot.lane.b32.xlu0 %v923, 126
    %v1039 = vpop.permute.xlu0 %1038
    %v1040 = vsel %vm333, %v1037, %v1039
    %v1041 = vsel %vm333, %v1039, %v1037
    %s1042 = sld [smem:[#allocation7 + $0x21]]
    %v1043 = vstv %s1042
    %v1044 = vmul.f32 %v1043, %v133
    %s1045 = sld [smem:[#allocation7 + $0x52]]
    %v1046 = vstv %s1045
    %v1047 = vmul.f32 %v1046, %v134
    %v1048 = vadd.f32 %v1044, %v1047
    %1050 = vset.pattern.permute.xlu0 0
    %1051 = vperm.xlu0 %1050, %v1048
    %v1052 = vpop.permute.xlu0 %1051
    %v1054 = vmul.f32 %v1052, %v1040
    %v1055 = vmul.f32 %v1052, %v1041
    %v1056 = vsel %vm352, %v1054, 0.0
    %v1057 = vsel %vm353, %v1055, 0.0
    %v1058 = vadd.f32 %v1034, %v1056
    %v1059 = vadd.f32 %v1035, %v1057
    %1060 = vrot.lane.b32.xlu0 %v922, 125
    %v1061 = vpop.permute.xlu0 %1060
    %1062 = vrot.lane.b32.xlu0 %v923, 125
    %v1063 = vpop.permute.xlu0 %1062
    %v1064 = vsel %vm362, %v1061, %v1063
    %v1065 = vsel %vm362, %v1063, %v1061
    %s1066 = sld [smem:[#allocation7 + $0x22]]
    %v1067 = vstv %s1066
    %v1068 = vmul.f32 %v1067, %v133
    %s1069 = sld [smem:[#allocation7 + $0x53]]
    %v1070 = vstv %s1069
    %v1071 = vmul.f32 %v1070, %v134
    %v1072 = vadd.f32 %v1068, %v1071
    %1074 = vset.pattern.permute.xlu0 0
    %1075 = vperm.xlu0 %1074, %v1072
    %v1076 = vpop.permute.xlu0 %1075
    %v1078 = vmul.f32 %v1076, %v1064
    %v1079 = vmul.f32 %v1076, %v1065
    %v1080 = vsel %vm381, %v1078, 0.0
    %v1081 = vsel %vm382, %v1079, 0.0
    %v1082 = vadd.f32 %v1058, %v1080
    %v1083 = vadd.f32 %v1059, %v1081
    %1084 = vrot.lane.b32.xlu0 %v131, 96
    %v1085 = vpop.permute.xlu0 %1084
    %1086 = vrot.lane.b32.xlu0 %v132, 96
    %v1087 = vpop.permute.xlu0 %1086
    %vm1088 = vcmp.lt.s32.totalorder %v136, 96
    %v1089 = vsel %vm1088, %v1085, %v1087
    %v1090 = vsel %vm1088, %v1087, %v1085
    %vm1091 = vcmp.ge.s32.totalorder %v140, 4294967294
    %vm1092 = vcmp.ge.s32.totalorder %v141, 4294967294
    %vm1093 = vcmp.le.s32.totalorder %v140, 13
    %vm1094 = vcmp.le.s32.totalorder %v141, 13
    %vm1095 = vmand %vm1091, %vm1093
    %vm1096 = vmand %vm1092, %vm1094
    %v1097 = vsel %vm1095, 1, 0
    %v1098 = vsel %vm1096, 1, 0
    %vm1099 = vcmp.eq.s32.totalorder %v1097, 1
    %vm1100 = vcmp.eq.s32.totalorder %v1098, 1
    %v1101 = vsel %vm1099, %v1089, 0.0
    %v1102 = vsel %vm1100, %v1090, 0.0
    %1103 = vrot.lane.b32.xlu0 %v1101, 3
    %v1104 = vpop.permute.xlu0 %1103
    %1105 = vrot.lane.b32.xlu0 %v1102, 3
    %v1106 = vpop.permute.xlu0 %1105
    %v1107 = vsel %vm201, %v1104, %v1106
    %v1108 = vsel %vm201, %v1106, %v1104
    %s1109 = sld [smem:[#allocation7 + $0x23]]
    %v1110 = vstv %s1109
    %v1111 = vmul.f32 %v1110, %v133
    %s1112 = sld [smem:[#allocation7 + $0x54]]
    %v1113 = vstv %s1112
    %v1114 = vmul.f32 %v1113, %v134
    %v1115 = vadd.f32 %v1111, %v1114
    %1117 = vset.pattern.permute.xlu0 0
    %1118 = vperm.xlu0 %1117, %v1115
    %v1119 = vpop.permute.xlu0 %1118
    %v1121 = vmul.f32 %v1119, %v1108
    %v1122 = vmul.f32 %v1119, %v1107
    %v1123 = vsel %vm220, %v1121, 0.0
    %v1124 = vsel %vm221, %v1122, 0.0
    %v1125 = vadd.f32 %v1082, %v1123
    %v1126 = vadd.f32 %v1083, %v1124
    %1127 = vrot.lane.b32.xlu0 %v1101, 2
    %v1128 = vpop.permute.xlu0 %1127
    %1129 = vrot.lane.b32.xlu0 %v1102, 2
    %v1130 = vpop.permute.xlu0 %1129
    %v1131 = vsel %vm230, %v1128, %v1130
    %v1132 = vsel %vm230, %v1130, %v1128
    %s1133 = sld [smem:[#allocation7 + $0x24]]
    %v1134 = vstv %s1133
    %v1135 = vmul.f32 %v1134, %v133
    %s1136 = sld [smem:[#allocation7 + $0x55]]
    %v1137 = vstv %s1136
    %v1138 = vmul.f32 %v1137, %v134
    %v1139 = vadd.f32 %v1135, %v1138
    %1141 = vset.pattern.permute.xlu0 0
    %1142 = vperm.xlu0 %1141, %v1139
    %v1143 = vpop.permute.xlu0 %1142
    %v1145 = vmul.f32 %v1143, %v1132
    %v1146 = vmul.f32 %v1143, %v1131
    %v1147 = vsel %vm249, %v1145, 0.0
    %v1148 = vsel %vm250, %v1146, 0.0
    %v1149 = vadd.f32 %v1125, %v1147
    %v1150 = vadd.f32 %v1126, %v1148
    %1151 = vrot.lane.b32.xlu0 %v1101, 1
    %v1152 = vpop.permute.xlu0 %1151
    %1153 = vrot.lane.b32.xlu0 %v1102, 1
    %v1154 = vpop.permute.xlu0 %1153
    %v1155 = vsel %vm259, %v1152, %v1154
    %v1156 = vsel %vm259, %v1154, %v1152
    %s1157 = sld [smem:[#allocation7 + $0x25]]
    %v1158 = vstv %s1157
    %v1159 = vmul.f32 %v1158, %v133
    %s1160 = sld [smem:[#allocation7 + $0x56]]
    %v1161 = vstv %s1160
    %v1162 = vmul.f32 %v1161, %v134
    %v1163 = vadd.f32 %v1159, %v1162
    %1165 = vset.pattern.permute.xlu0 0
    %1166 = vperm.xlu0 %1165, %v1163
    %v1167 = vpop.permute.xlu0 %1166
    %v1169 = vmul.f32 %v1167, %v1156
    %v1170 = vmul.f32 %v1167, %v1155
    %v1171 = vsel %vm278, %v1169, 0.0
    %v1172 = vsel %vm279, %v1170, 0.0
    %v1173 = vadd.f32 %v1149, %v1171
    %v1174 = vadd.f32 %v1150, %v1172
    %s1175 = sld [smem:[#allocation7 + $0x26]]
    %v1176 = vstv %s1175
    %v1177 = vmul.f32 %v1176, %v133
    %s1178 = sld [smem:[#allocation7 + $0x57]]
    %v1179 = vstv %s1178
    %v1180 = vmul.f32 %v1179, %v134
    %v1181 = vadd.f32 %v1177, %v1180
    %1183 = vset.pattern.permute.xlu0 0
    %1184 = vperm.xlu0 %1183, %v1181
    %v1185 = vpop.permute.xlu0 %1184
    %v1187 = vmul.f32 %v1185, %v1101
    %v1188 = vmul.f32 %v1185, %v1102
    %v1189 = vadd.f32 %v1173, %v1187
    %v1190 = vadd.f32 %v1174, %v1188
    %1191 = vrot.lane.b32.xlu0 %v1101, 127
    %v1192 = vpop.permute.xlu0 %1191
    %1193 = vrot.lane.b32.xlu0 %v1102, 127
    %v1194 = vpop.permute.xlu0 %1193
    %v1195 = vsel %vm304, %v1192, %v1194
    %v1196 = vsel %vm304, %v1194, %v1192
    %s1197 = sld [smem:[#allocation7 + $0x27]]
    %v1198 = vstv %s1197
    %v1199 = vmul.f32 %v1198, %v133
    %s1200 = sld [smem:[#allocation7 + $0x58]]
    %v1201 = vstv %s1200
    %v1202 = vmul.f32 %v1201, %v134
    %v1203 = vadd.f32 %v1199, %v1202
    %1205 = vset.pattern.permute.xlu0 0
    %1206 = vperm.xlu0 %1205, %v1203
    %v1207 = vpop.permute.xlu0 %1206
    %v1209 = vmul.f32 %v1207, %v1195
    %v1210 = vmul.f32 %v1207, %v1196
    %v1211 = vsel %vm323, %v1209, 0.0
    %v1212 = vsel %vm324, %v1210, 0.0
    %v1213 = vadd.f32 %v1189, %v1211
    %v1214 = vadd.f32 %v1190, %v1212
    %1215 = vrot.lane.b32.xlu0 %v1101, 126
    %v1216 = vpop.permute.xlu0 %1215
    %1217 = vrot.lane.b32.xlu0 %v1102, 126
    %v1218 = vpop.permute.xlu0 %1217
    %v1219 = vsel %vm333, %v1216, %v1218
    %v1220 = vsel %vm333, %v1218, %v1216
    %s1221 = sld [smem:[#allocation7 + $0x28]]
    %v1222 = vstv %s1221
    %v1223 = vmul.f32 %v1222, %v133
    %s1224 = sld [smem:[#allocation7 + $0x59]]
    %v1225 = vstv %s1224
    %v1226 = vmul.f32 %v1225, %v134
    %v1227 = vadd.f32 %v1223, %v1226
    %1229 = vset.pattern.permute.xlu0 0
    %1230 = vperm.xlu0 %1229, %v1227
    %v1231 = vpop.permute.xlu0 %1230
    %v1233 = vmul.f32 %v1231, %v1219
    %v1234 = vmul.f32 %v1231, %v1220
    %v1235 = vsel %vm352, %v1233, 0.0
    %v1236 = vsel %vm353, %v1234, 0.0
    %v1237 = vadd.f32 %v1213, %v1235
    %v1238 = vadd.f32 %v1214, %v1236
    %1239 = vrot.lane.b32.xlu0 %v1101, 125
    %v1240 = vpop.permute.xlu0 %1239
    %1241 = vrot.lane.b32.xlu0 %v1102, 125
    %v1242 = vpop.permute.xlu0 %1241
    %v1243 = vsel %vm362, %v1240, %v1242
    %v1244 = vsel %vm362, %v1242, %v1240
    %s1245 = sld [smem:[#allocation7 + $0x29]]
    %v1246 = vstv %s1245
    %v1247 = vmul.f32 %v1246, %v133
    %s1248 = sld [smem:[#allocation7 + $0x5a]]
    %v1249 = vstv %s1248
    %v1250 = vmul.f32 %v1249, %v134
    %v1251 = vadd.f32 %v1247, %v1250
    %1253 = vset.pattern.permute.xlu0 0
    %1254 = vperm.xlu0 %1253, %v1251
    %v1255 = vpop.permute.xlu0 %1254
    %v1257 = vmul.f32 %v1255, %v1243
    %v1258 = vmul.f32 %v1255, %v1244
    %v1259 = vsel %vm381, %v1257, 0.0
    %v1260 = vsel %vm382, %v1258, 0.0
    %v1261 = vadd.f32 %v1237, %v1259
    %v1262 = vadd.f32 %v1238, %v1260
    %1263 = vrot.lane.b32.xlu0 %v131, 80
    %v1264 = vpop.permute.xlu0 %1263
    %1265 = vrot.lane.b32.xlu0 %v132, 80
    %v1266 = vpop.permute.xlu0 %1265
    %vm1267 = vcmp.lt.s32.totalorder %v136, 80
    %v1268 = vsel %vm1267, %v1264, %v1266
    %v1269 = vsel %vm1267, %v1266, %v1264
    %vm1270 = vcmp.ge.s32.totalorder %v140, 4294967293
    %vm1271 = vcmp.ge.s32.totalorder %v141, 4294967293
    %vm1272 = vcmp.le.s32.totalorder %v140, 12
    %vm1273 = vcmp.le.s32.totalorder %v141, 12
    %vm1274 = vmand %vm1270, %vm1272
    %vm1275 = vmand %vm1271, %vm1273
    %v1276 = vsel %vm1274, 1, 0
    %v1277 = vsel %vm1275, 1, 0
    %vm1278 = vcmp.eq.s32.totalorder %v1276, 1
    %vm1279 = vcmp.eq.s32.totalorder %v1277, 1
    %v1280 = vsel %vm1278, %v1268, 0.0
    %v1281 = vsel %vm1279, %v1269, 0.0
    %1282 = vrot.lane.b32.xlu0 %v1280, 3
    %v1283 = vpop.permute.xlu0 %1282
    %1284 = vrot.lane.b32.xlu0 %v1281, 3
    %v1285 = vpop.permute.xlu0 %1284
    %v1286 = vsel %vm201, %v1283, %v1285
    %v1287 = vsel %vm201, %v1285, %v1283
    %s1288 = sld [smem:[#allocation7 + $0x2a]]
    %v1289 = vstv %s1288
    %v1290 = vmul.f32 %v1289, %v133
    %s1291 = sld [smem:[#allocation7 + $0x5b]]
    %v1292 = vstv %s1291
    %v1293 = vmul.f32 %v1292, %v134
    %v1294 = vadd.f32 %v1290, %v1293
    %1296 = vset.pattern.permute.xlu0 0
    %1297 = vperm.xlu0 %1296, %v1294
    %v1298 = vpop.permute.xlu0 %1297
    %v1300 = vmul.f32 %v1298, %v1287
    %v1301 = vmul.f32 %v1298, %v1286
    %v1302 = vsel %vm220, %v1300, 0.0
    %v1303 = vsel %vm221, %v1301, 0.0
    %v1304 = vadd.f32 %v1261, %v1302
    %v1305 = vadd.f32 %v1262, %v1303
    %1306 = vrot.lane.b32.xlu0 %v1280, 2
    %v1307 = vpop.permute.xlu0 %1306
    %1308 = vrot.lane.b32.xlu0 %v1281, 2
    %v1309 = vpop.permute.xlu0 %1308
    %v1310 = vsel %vm230, %v1307, %v1309
    %v1311 = vsel %vm230, %v1309, %v1307
    %s1312 = sld [smem:[#allocation7 + $0x2b]]
    %v1313 = vstv %s1312
    %v1314 = vmul.f32 %v1313, %v133
    %s1315 = sld [smem:[#allocation7 + $0x5c]]
    %v1316 = vstv %s1315
    %v1317 = vmul.f32 %v1316, %v134
    %v1318 = vadd.f32 %v1314, %v1317
    %1320 = vset.pattern.permute.xlu0 0
    %1321 = vperm.xlu0 %1320, %v1318
    %v1322 = vpop.permute.xlu0 %1321
    %v1324 = vmul.f32 %v1322, %v1311
    %v1325 = vmul.f32 %v1322, %v1310
    %v1326 = vsel %vm249, %v1324, 0.0
    %v1327 = vsel %vm250, %v1325, 0.0
    %v1328 = vadd.f32 %v1304, %v1326
    %v1329 = vadd.f32 %v1305, %v1327
    %1330 = vrot.lane.b32.xlu0 %v1280, 1
    %v1331 = vpop.permute.xlu0 %1330
    %1332 = vrot.lane.b32.xlu0 %v1281, 1
    %v1333 = vpop.permute.xlu0 %1332
    %v1334 = vsel %vm259, %v1331, %v1333
    %v1335 = vsel %vm259, %v1333, %v1331
    %s1336 = sld [smem:[#allocation7 + $0x2c]]
    %v1337 = vstv %s1336
    %v1338 = vmul.f32 %v1337, %v133
    %s1339 = sld [smem:[#allocation7 + $0x5d]]
    %v1340 = vstv %s1339
    %v1341 = vmul.f32 %v1340, %v134
    %v1342 = vadd.f32 %v1338, %v1341
    %1344 = vset.pattern.permute.xlu0 0
    %1345 = vperm.xlu0 %1344, %v1342
    %v1346 = vpop.permute.xlu0 %1345
    %v1348 = vmul.f32 %v1346, %v1335
    %v1349 = vmul.f32 %v1346, %v1334
    %v1350 = vsel %vm278, %v1348, 0.0
    %v1351 = vsel %vm279, %v1349, 0.0
    %v1352 = vadd.f32 %v1328, %v1350
    %v1353 = vadd.f32 %v1329, %v1351
    %s1354 = sld [smem:[#allocation7 + $0x2d]]
    %v1355 = vstv %s1354
    %v1356 = vmul.f32 %v1355, %v133
    %s1357 = sld [smem:[#allocation7 + $0x5e]]
    %v1358 = vstv %s1357
    %v1359 = vmul.f32 %v1358, %v134
    %v1360 = vadd.f32 %v1356, %v1359
    %1362 = vset.pattern.permute.xlu0 0
    %1363 = vperm.xlu0 %1362, %v1360
    %v1364 = vpop.permute.xlu0 %1363
    %v1366 = vmul.f32 %v1364, %v1280
    %v1367 = vmul.f32 %v1364, %v1281
    %v1368 = vadd.f32 %v1352, %v1366
    %v1369 = vadd.f32 %v1353, %v1367
    %1370 = vrot.lane.b32.xlu0 %v1280, 127
    %v1371 = vpop.permute.xlu0 %1370
    %1372 = vrot.lane.b32.xlu0 %v1281, 127
    %v1373 = vpop.permute.xlu0 %1372
    %v1374 = vsel %vm304, %v1371, %v1373
    %v1375 = vsel %vm304, %v1373, %v1371
    %s1376 = sld [smem:[#allocation7 + $0x2e]]
    %v1377 = vstv %s1376
    %v1378 = vmul.f32 %v1377, %v133
    %s1379 = sld [smem:[#allocation7 + $0x5f]]
    %v1380 = vstv %s1379
    %v1381 = vmul.f32 %v1380, %v134
    %v1382 = vadd.f32 %v1378, %v1381
    %1384 = vset.pattern.permute.xlu0 0
    %1385 = vperm.xlu0 %1384, %v1382
    %v1386 = vpop.permute.xlu0 %1385
    %v1388 = vmul.f32 %v1386, %v1374
    %v1389 = vmul.f32 %v1386, %v1375
    %v1390 = vsel %vm323, %v1388, 0.0
    %v1391 = vsel %vm324, %v1389, 0.0
    %v1392 = vadd.f32 %v1368, %v1390
    %v1393 = vadd.f32 %v1369, %v1391
    %1394 = vrot.lane.b32.xlu0 %v1280, 126
    %v1395 = vpop.permute.xlu0 %1394
    %1396 = vrot.lane.b32.xlu0 %v1281, 126
    %v1397 = vpop.permute.xlu0 %1396
    %v1398 = vsel %vm333, %v1395, %v1397
    %v1399 = vsel %vm333, %v1397, %v1395
    %s1400 = sld [smem:[#allocation7 + $0x2f]]
    %v1401 = vstv %s1400
    %v1402 = vmul.f32 %v1401, %v133
    %s1403 = sld [smem:[#allocation7 + $0x60]]
    %v1404 = vstv %s1403
    %v1405 = vmul.f32 %v1404, %v134
    %v1406 = vadd.f32 %v1402, %v1405
    %1408 = vset.pattern.permute.xlu0 0
    %1409 = vperm.xlu0 %1408, %v1406
    %v1410 = vpop.permute.xlu0 %1409
    %v1412 = vmul.f32 %v1410, %v1398
    %v1413 = vmul.f32 %v1410, %v1399
    %v1414 = vsel %vm352, %v1412, 0.0
    %v1415 = vsel %vm353, %v1413, 0.0
    %v1416 = vadd.f32 %v1392, %v1414
    %v1417 = vadd.f32 %v1393, %v1415
    %1418 = vrot.lane.b32.xlu0 %v1280, 125
    %v1419 = vpop.permute.xlu0 %1418
    %1420 = vrot.lane.b32.xlu0 %v1281, 125
    %v1421 = vpop.permute.xlu0 %1420
    %v1422 = vsel %vm362, %v1419, %v1421
    %v1423 = vsel %vm362, %v1421, %v1419
    %s1424 = sld [smem:[#allocation7 + $0x30]]
    %v1425 = vstv %s1424
    %v1426 = vmul.f32 %v1425, %v133
    %s1427 = sld [smem:[#allocation7 + $0x61]]
    %v1428 = vstv %s1427
    %v1429 = vmul.f32 %v1428, %v134
    %v1430 = vadd.f32 %v1426, %v1429
    %1432 = vset.pattern.permute.xlu0 0
    %1433 = vperm.xlu0 %1432, %v1430
    %v1434 = vpop.permute.xlu0 %1433
    %v1436 = vmul.f32 %v1434, %v1422
    %v1437 = vmul.f32 %v1434, %v1423
    %v1438 = vsel %vm381, %v1436, 0.0
    %v1439 = vsel %vm382, %v1437, 0.0
    %v1440 = vadd.f32 %v1416, %v1438
    %v1441 = vadd.f32 %v1417, %v1439
    %v1444 = vrot.slane %v1440, 2
    %v1445 = vrot.slane %v1441, 2
    %v1448 = vadd.f32 %v1440, %v1444
    %v1449 = vadd.f32 %v1441, %v1445
    %s1450 = sld [smem:[#allocation2]]
    %v1451 = vstv %s1450
    %v1452 = vadd.f32 %v1448, %v1451
    %v1453 = vadd.f32 %v1449, %v1451
    %v1454 = vmax.f32 %v1452, 0.0
    %v1455 = vmax.f32 %v1453, 0.0
    %v1456 = vxor.u32 %v1454, 2147483648
    %v1457 = vxor.u32 %v1455, 2147483648
    %v1458 = vmul.f32 %v1456, 1.442695
    %v1459 = vpow.pop %v1458
    %v1460 = vmul.f32 %v1457, 1.442695
    %v1461 = vpow.pop %v1460
    %v1462 = vadd.f32 %v1459, 1.0
    %v1463 = vadd.f32 %v1461, 1.0
    %v1464 = vrcp.pop %v1462
    %v1465 = vmul.f32 1.0, %v1464
    %v1466 = vrcp.pop %v1463
    %v1467 = vmul.f32 1.0, %v1466
    %v1470 = vcombine.low %v1465, %v1467
    %v1472 = vunpack.c.l.s4 1966171168
    %v1473 = vunpack.c.0.s8 %v1472
    %v1474 = vlaneseq
    %v1475 = vshrl.u32 %v1474, 7
    %v1476 = vsub.s32 %v1473, %v1475
    %v1477 = vrot.slane %v1470, %v1476
    %v1478 = vcombine.high %v1477, %v1477
    %v1480 = vunpack.c.l.s4 1966171168
    %v1481 = vunpack.c.0.s8 %v1480
    %v1482 = vlaneseq
    %v1483 = vshrl.u32 %v1482, 7
    %v1484 = vsub.s32 %v1481, %v1483
    %v1485 = vrot.slane %v1477, %v1484
    %v1487 = vunpack.c.l.s4 1966171168
    %v1488 = vunpack.c.0.s8 %v1487
    %v1489 = vlaneseq
    %v1490 = vshrl.u32 %v1489, 7
    %v1491 = vsub.s32 %v1488, %v1490
    %v1492 = vrot.slane %v1478, %v1491
    %v1493 = vlaneseq
    %v1494 = vshrl.u32 %v1493, 7
    %v1495 = vsub.s32 0, %v1494
    %v1496 = vrot.slane %v1485, %v1495
    %v1497 = vlaneseq
    %v1498 = vshrl.u32 %v1497, 7
    %v1499 = vsub.s32 1, %v1498
    %v1500 = vrot.slane %v1485, %v1499
    %v1501 = vlaneseq
    %v1502 = vshrl.u32 %v1501, 7
    %v1503 = vsub.s32 0, %v1502
    %v1504 = vrot.slane %v1492, %v1503
    %v1505 = vlaneseq
    %v1506 = vshrl.u32 %v1505, 7
    %v1507 = vsub.s32 1, %v1506
    %v1508 = vrot.slane %v1492, %v1507
    %v1509 = vcombine.low %v1496, %v1500
    %v1510 = vcombine.low %v1504, %v1508
    %v1513 = vmul.f32 %v43, %v1509
    %v1514 = vmul.f32 %v44, %v1510
    %1515 = vst [vmem:[#allocation8] sm:$0xff] %v1513
    %1516 = vst [vmem:[#allocation8 + $0x8] sm:$0xff] %v1514
    // Predicated region
    $region22: #{tpu_custom_call.1} parent=1 // pred_check
      _
    $region23: #{tpu_custom_call.1} parent=1 // pred_check_branch
      %1518 = sbr.rel (0) target = $region25
    $region24: #{tpu_custom_call.1} parent=1 // pred_region
      %s1520 = ssub.s32 256, 256
      %1521 = vsyncadd [#allocation5], %s1520
      %s1522 = sshll.u32 [#allocation8], 4
      %s1523 = int_to_ptr.vmem [resolvable:$true] %s1522
      %1528 = dma.vmem_to_hbm [thread:$0]  %s1523, 256, %s3, [#allocation5], 128, 128, 8
    $region25: #{tpu_custom_call.1} parent=1 // pred_fallthru
      _
    // Predicated region
    $region26: #{tpu_custom_call.1} parent=1 // pred_check
      _
    $region27: #{tpu_custom_call.1} parent=1 // pred_check_branch
      %1530 = sbr.rel (0) target = $region29
    $region28: #{tpu_custom_call.1} parent=1 // pred_region
      %1531 = dma.done [#allocation5], 256
    $region29: #{tpu_custom_call.1} parent=1 // pred_fallthru
      _
    %1532 = vsyncpa [#allocation4], 1
    %1533 = vsyncpa [#allocation5], 1
    %1534 = vsyncpa [#allocation6], 1

</llo_original>
